<compile_context>
chip_gen: v7x
topology: tpu7x:2x2x1
jax: 0.10.0
libtpu: 0.0.40
codegen_flags: <defaults>
</compile_context>

<pallas_src>
import math
import functools

import jax
import jax.numpy as jnp
from jax.experimental import pallas as pl
from jax.experimental.pallas import tpu as pltpu


_NEG_INF = -1e6          # d2l masked_softmax fill value (matches reference)
_LN_EPS = 1e-5
_VMEM_CAP = 64 << 20     # never request more scoped VMEM than v7x physical


def _pick_row_tile(m, cap=512):
    """Largest row tile <= cap that evenly divides m (multiple of 8 preferred)."""
    for t in (512, 256, 128, 64, 32, 16, 8):
        if t <= cap and m % t == 0:
            return t
    return m


def _vmem_limit(resident_bytes):
    """Explicit scoped-VMEM limit: 2x headroom over static buffers, 16 MiB floor."""
    return int(min(max(2 * resident_bytes + (4 << 20), 16 << 20), _VMEM_CAP))


# -----------------------------------------------------------------------------
# Kernel 1/2: fused MHA (projections + attention + head merge) + Wo + Add&Norm
# -----------------------------------------------------------------------------
def _mha_addnorm_kernel(*refs, n_heads, scale, eps, masked):
    if masked:
        (vl_ref, xq_ref, xkv_ref, wq_ref, bq_ref, wkv_ref, bkv_ref,
         wo_ref, bo_ref, g_ref, beta_ref, o_ref, ctx_ref) = refs
    else:
        (xq_ref, xkv_ref, wq_ref, bq_ref, wkv_ref, bkv_ref,
         wo_ref, bo_ref, g_ref, beta_ref, o_ref, ctx_ref) = refs

    f32 = jnp.float32
    bf16 = jnp.bfloat16

    xq = xq_ref[0].astype(f32)                       # (Tq, D) residual kept in f32

    # Q projection and fused K|V projection (bf16 weights, f32 accumulation).
    q = jnp.dot(xq_ref[0].astype(bf16), wq_ref[...],
                preferred_element_type=f32) + bq_ref[...]            # (Tq, H)
    kv = jnp.dot(xkv_ref[0].astype(bf16), wkv_ref[...],
                 preferred_element_type=f32) + bkv_ref[...]          # (Tk, 2H)

    Tq, H = q.shape
    Tk = kv.shape[0]
    Dh = H // n_heads

    qb = q.astype(bf16)
    kb = kv[:, :H].astype(bf16)
    vb = kv[:, H:].astype(bf16)

    if masked:
        valid = vl_ref[pl.program_id(0)]
        col = jax.lax.broadcasted_iota(jnp.int32, (Tq, Tk), 1)
        mask = col < valid

    if Dh % 128 == 0 and n_heads > 1:
        # Head-batched MXU path (lane-aligned head dim): one batched dot_general
        # over the head axis instead of n_heads small matmuls.
        q3 = jnp.swapaxes(qb.reshape(Tq, n_heads, Dh), 0, 1)        # (nh, Tq, Dh)
        k3 = jnp.swapaxes(kb.reshape(Tk, n_heads, Dh), 0, 1)        # (nh, Tk, Dh)
        v3 = jnp.swapaxes(vb.reshape(Tk, n_heads, Dh), 0, 1)        # (nh, Tk, Dh)
        s = jnp.einsum('nqd,nkd->nqk', q3, k3,
                       preferred_element_type=f32) * scale          # (nh, Tq, Tk)
        if masked:
            s = jnp.where(mask[None, :, :], s, _NEG_INF)
        s = s - jnp.max(s, axis=-1, keepdims=True)
        p = jnp.exp(s)
        p = p / jnp.sum(p, axis=-1, keepdims=True)                  # exact divide
        c = jnp.einsum('nqk,nkd->nqd', p.astype(bf16), v3,
                       preferred_element_type=f32)                  # (nh, Tq, Dh)
        ctx_ref[...] = jnp.swapaxes(c, 0, 1).reshape(Tq, H)
    else:
        # Small-head fallback: static unroll, contexts written straight into the
        # (Tq, H) VMEM scratch slice (no concat, no long-lived accumulator list).
        for h in range(n_heads):
            sl = slice(h * Dh, (h + 1) * Dh)
            s = jax.lax.dot_general(qb[:, sl], kb[:, sl],
                                    (((1,), (1,)), ((), ())),
                                    preferred_element_type=f32) * scale
            if masked:
                s = jnp.where(mask, s, _NEG_INF)
            s = s - jnp.max(s, axis=-1, keepdims=True)
            p = jnp.exp(s)
            p = p / jnp.sum(p, axis=-1, keepdims=True)              # exact divide
            ctx_ref[:, sl] = jnp.dot(p.astype(bf16), vb[:, sl],
                                     preferred_element_type=f32)

    # TODO(synk): attention-weight dropout skipped (eval mode -> identity)
    # TODO(synk): for long sequences, tile Tq / stream Tk flash-style instead of
    # materializing the full (Tq, Tk) score matrix per batch element.

    # Fused epilogue: W_o projection + bias + residual + LayerNorm.
    proj = jnp.dot(ctx_ref[...].astype(bf16), wo_ref[...],
                   preferred_element_type=f32) + bo_ref[...]
    z = proj + xq
    mean = jnp.mean(z, axis=-1, keepdims=True)
    zc = z - mean
    var = jnp.mean(zc * zc, axis=-1, keepdims=True)
    inv = jax.lax.rsqrt(var + eps)
    o_ref[0] = (zc * inv * g_ref[...] + beta_ref[...]).astype(o_ref.dtype)


def fused_mha_addnorm(queries, keys, valid_lens, attn, ln_g, ln_b, n_heads):
    B, Tq, D = queries.shape
    Tk = keys.shape[1]
    wq, bq = attn["wq"], attn["bq"]
    wkv, bkv = attn["wkv"], attn["bkv"]
    wo, bo = attn["wo"], attn["bo"]
    H = wq.shape[1]
    Dh = H // n_heads
    scale = 1.0 / math.sqrt(Dh)
    masked = valid_lens is not None

    def row_map(b, *_):
        return (b, 0, 0)

    def const_map(b, *_):
        return (0, 0)

    def wspec(shape):
        # Constant-index weights: single-buffer (their block never changes).
        return pl.BlockSpec(shape, const_map, pipeline_mode=pl.Buffered(1))

    in_specs = [
        pl.BlockSpec((1, Tq, D), row_map),
        pl.BlockSpec((1, Tk, D), row_map),
        wspec((D, H)),           # wq  (bf16)
        wspec((1, H)),           # bq
        wspec((D, 2 * H)),       # wkv (bf16)
        wspec((1, 2 * H)),       # bkv
        wspec((H, H)),           # wo  (bf16)
        wspec((1, H)),           # bo
        wspec((1, H)),           # ln gamma
        wspec((1, H)),           # ln beta
    ]

    args = (queries, keys, wq, bq.reshape(1, H), wkv, bkv.reshape(1, 2 * H),
            wo, bo.reshape(1, H), ln_g.reshape(1, H), ln_b.reshape(1, H))
    if masked:
        args = (valid_lens.astype(jnp.int32),) + args

    grid_spec = pltpu.PrefetchScalarGridSpec(
        num_scalar_prefetch=1 if masked else 0,
        grid=(B,),
        in_specs=in_specs,
        out_specs=pl.BlockSpec((1, Tq, H), row_map),
        scratch_shapes=[pltpu.VMEM((Tq, H), jnp.float32)],
    )

    # Static buffer footprint (bf16 weights single-buffered, activations 2x).
    resident = (2 * (D * H + D * 2 * H + H * H)          # bf16 weights
                + 4 * (6 * H)                            # biases + LN params
                + 4 * (Tq * D + Tk * D) * 2              # input tiles (2x-buffered)
                + 4 * Tq * H * 2                         # output tile (2x-buffered)
                + 4 * Tq * H                             # ctx scratch
                + 4 * (Tq * H + Tk * 2 * H + n_heads * Tq * Tk))  # live intermediates

    flops = 2 * B * (Tq * D * H + Tk * D * 2 * H
                     + 2 * n_heads * Tq * Tk * Dh * 2 + Tq * H * H) + 8 * B * Tq * H
    bytes_accessed = (4 * B * (Tq * D + Tk * D + Tq * H)
                      + 2 * (D * H + D * 2 * H + H * H) + 4 * 6 * H)

    return pl.pallas_call(
        functools.partial(_mha_addnorm_kernel, n_heads=n_heads, scale=scale,
                          eps=_LN_EPS, masked=masked),
        out_shape=jax.ShapeDtypeStruct((B, Tq, H), queries.dtype),
        grid_spec=grid_spec,
        compiler_params=pltpu.CompilerParams(
            dimension_semantics=("parallel",),
            vmem_limit_bytes=_vmem_limit(resident)),
        cost_estimate=pl.CostEstimate(
            flops=flops,
            transcendentals=B * (n_heads * Tq * Tk + Tq),
            bytes_accessed=bytes_accessed),
    )(*args)


# -----------------------------------------------------------------------------
# Kernel 3: FFN (W2(relu(W1 y + b1)) + b2) + residual + LayerNorm (fused)
# -----------------------------------------------------------------------------
def _ffn_addnorm_kernel(y_ref, w1_ref, b1_ref, w2_ref, b2_ref, g_ref, beta_ref,
                        o_ref, *, eps):
    f32 = jnp.float32
    bf16 = jnp.bfloat16
    y = y_ref[...].astype(f32)
    h = jnp.dot(y_ref[...].astype(bf16), w1_ref[...],
                preferred_element_type=f32) + b1_ref[...]
    h = jnp.maximum(h, 0.0)
    f = jnp.dot(h.astype(bf16), w2_ref[...],
                preferred_element_type=f32) + b2_ref[...]
    z = f + y
    mean = jnp.mean(z, axis=-1, keepdims=True)
    zc = z - mean
    var = jnp.mean(zc * zc, axis=-1, keepdims=True)
    inv = jax.lax.rsqrt(var + eps)
    o_ref[...] = (zc * inv * g_ref[...] + beta_ref[...]).astype(o_ref.dtype)


def ffn_add_norm(y, w1, b1, w2, b2, gamma, beta, eps=_LN_EPS):
    M, D = y.shape
    F = w1.shape[1]
    # Cap the row tile so the live (tm, F) f32 intermediate stays ~2 MiB.
    cap = max(8, min(512, (2 << 20) // max(F * 4, 1)))
    tm = _pick_row_tile(M, cap=cap)

    def row_map(i):
        return (i, 0)

    def const_map(i):
        return (0, 0)

    def wspec(shape):
        return pl.BlockSpec(shape, const_map, pipeline_mode=pl.Buffered(1))

    resident = (2 * (D * F + F * D)               # bf16 weights single-buffered
                + 4 * (F + 3 * D)                 # biases + LN params
                + 4 * tm * D * 2 * 2              # in/out tiles (2x-buffered)
                + 4 * tm * F + 4 * tm * D)        # live intermediates

    flops = 2 * M * D * F + 2 * M * F * D + 8 * M * D
    bytes_accessed = 4 * (2 * M * D) + 2 * (2 * D * F) + 4 * (F + 3 * D)

    return pl.pallas_call(
        functools.partial(_ffn_addnorm_kernel, eps=eps),
        out_shape=jax.ShapeDtypeStruct((M, D), y.dtype),
        grid=(M // tm,),
        in_specs=[
            pl.BlockSpec((tm, D), row_map),
            wspec((D, F)),
            wspec((1, F)),
            wspec((F, D)),
            wspec((1, D)),
            wspec((1, D)),
            wspec((1, D)),
        ],
        out_specs=pl.BlockSpec((tm, D), row_map),
        compiler_params=pltpu.CompilerParams(
            dimension_semantics=("parallel",),
            vmem_limit_bytes=_vmem_limit(resident)),
        cost_estimate=pl.CostEstimate(flops=flops, transcendentals=M,
                                      bytes_accessed=bytes_accessed),
    )(y, w1, b1.reshape(1, F), w2, b2.reshape(1, D),
      gamma.reshape(1, D), beta.reshape(1, D))


# -----------------------------------------------------------------------------
# DecoderBlock forward (eval mode)
# -----------------------------------------------------------------------------
def decoder_block_forward(params, X, Y_enc, len_enc, n_heads, K=None):
    if K is None:
        K = X
    else:
        K = jnp.concatenate((K, X), axis=1)

    B, T, H = X.shape
    M = B * T

    # Self-attention (eval: len_dec is None -> unmasked, mask path compiled out),
    # fused with W_o + residual + LayerNorm.
    Y = fused_mha_addnorm(X, K, None, params["attn1"],
                          params["ln1_g"], params["ln1_b"], n_heads)

    # Cross-attention masked by encoder valid lengths, fused with W_o + Add&Norm.
    Y2 = fused_mha_addnorm(Y, Y_enc, len_enc, params["attn2"],
                           params["ln2_g"], params["ln2_b"], n_heads)

    # FFN + final Add&Norm (single fused kernel).
    out = ffn_add_norm(Y2.reshape(M, H), params["ffn_w1"], params["ffn_b1"],
                       params["ffn_w2"], params["ffn_b2"],
                       params["ln3_g"], params["ln3_b"]).reshape(B, T, H)
    return out, K


# -----------------------------------------------------------------------------
# Deterministic parameter init (bf16 weights, K|V projection pre-fused)
# -----------------------------------------------------------------------------
def init_params(key, n_hidden, ffn_hidden):
    keys = jax.random.split(key, 12)

    def w(k, shape):
        # Pre-cast weights to bf16 on the host: halves weight DMA and VMEM.
        return (jax.random.normal(k, shape, jnp.float32) * 0.02).astype(jnp.bfloat16)

    def mha(ks):
        wk = w(ks[1], (n_hidden, n_hidden))
        wv = w(ks[2], (n_hidden, n_hidden))
        return dict(
            wq=w(ks[0], (n_hidden, n_hidden)), bq=jnp.zeros((n_hidden,), jnp.float32),
            wkv=jnp.concatenate([wk, wv], axis=1),
            bkv=jnp.zeros((2 * n_hidden,), jnp.float32),
            wo=w(ks[3], (n_hidden, n_hidden)), bo=jnp.zeros((n_hidden,), jnp.float32),
        )

    return dict(
        attn1=mha(keys[0:4]),
        attn2=mha(keys[4:8]),
        ln1_g=jnp.ones((n_hidden,), jnp.float32), ln1_b=jnp.zeros((n_hidden,), jnp.float32),
        ln2_g=jnp.ones((n_hidden,), jnp.float32), ln2_b=jnp.zeros((n_hidden,), jnp.float32),
        ln3_g=jnp.ones((n_hidden,), jnp.float32), ln3_b=jnp.zeros((n_hidden,), jnp.float32),
        ffn_w1=w(keys[8], (n_hidden, ffn_hidden)), ffn_b1=jnp.zeros((ffn_hidden,), jnp.float32),
        ffn_w2=w(keys[9], (ffn_hidden, n_hidden)), ffn_b2=jnp.zeros((n_hidden,), jnp.float32),
    )


if __name__ == "__main__":
    B, T_dec, T_enc = 2, 8, 8
    n_hidden, n_heads, ffn_hidden = 32, 4, 64

    key = jax.random.PRNGKey(0)
    kx, ky, kp = jax.random.split(key, 3)

    X = jax.random.normal(kx, (B, T_dec, n_hidden), jnp.float32)
    Y_enc = jax.random.normal(ky, (B, T_enc, n_hidden), jnp.float32)
    len_enc = jnp.array([5, 8], dtype=jnp.int32)

    params = init_params(kp, n_hidden, ffn_hidden)

    out, K = decoder_block_forward(params, X, Y_enc, len_enc, n_heads, K=None)
    jax.block_until_ready(out)
    jax.block_until_ready(K)

    assert out.shape == (B, T_dec, n_hidden)
    assert K.shape == (B, T_dec, n_hidden)
    assert bool(jnp.all(jnp.isfinite(out)))
    print("KERNEL_OK")
</pallas_src>

<mosaic_0001>
module attributes {stable_mosaic.version = 11 : i64} {
  func.func @_mha_addnorm_kernel(%arg0: i32, %arg1: memref<1x8x32xf32, #tpu.memory_space<vmem>>, %arg2: memref<1x8x32xf32, #tpu.memory_space<vmem>>, %arg3: memref<32x32xbf16, #tpu.memory_space<vmem>>, %arg4: memref<1x32xf32, #tpu.memory_space<vmem>>, %arg5: memref<32x64xbf16, #tpu.memory_space<vmem>>, %arg6: memref<1x64xf32, #tpu.memory_space<vmem>>, %arg7: memref<32x32xbf16, #tpu.memory_space<vmem>>, %arg8: memref<1x32xf32, #tpu.memory_space<vmem>>, %arg9: memref<1x32xf32, #tpu.memory_space<vmem>>, %arg10: memref<1x32xf32, #tpu.memory_space<vmem>>, %arg11: memref<1x8x32xf32, #tpu.memory_space<vmem>>, %arg12: memref<8x32xf32, #tpu.memory_space<vmem>>) attributes {dimension_semantics = [#tpu.dimension_semantics<parallel>], iteration_bounds = array<i64: 2>, scalar_prefetch = 0 : i64, scratch_operands = 1 : i64, tpu.core_type = #tpu.core_type<tc>, window_params = [{transform_indices = @transform_0, window_bounds = array<i64: 1, 8, 32>}, {transform_indices = @transform_1, window_bounds = array<i64: 1, 8, 32>}, {pipeline_mode = #tpu.pipeline_mode<synchronous>, transform_indices = @transform_2, window_bounds = array<i64: 32, 32>}, {pipeline_mode = #tpu.pipeline_mode<synchronous>, transform_indices = @transform_3, window_bounds = array<i64: 1, 32>}, {pipeline_mode = #tpu.pipeline_mode<synchronous>, transform_indices = @transform_4, window_bounds = array<i64: 32, 64>}, {pipeline_mode = #tpu.pipeline_mode<synchronous>, transform_indices = @transform_5, window_bounds = array<i64: 1, 64>}, {pipeline_mode = #tpu.pipeline_mode<synchronous>, transform_indices = @transform_6, window_bounds = array<i64: 32, 32>}, {pipeline_mode = #tpu.pipeline_mode<synchronous>, transform_indices = @transform_7, window_bounds = array<i64: 1, 32>}, {pipeline_mode = #tpu.pipeline_mode<synchronous>, transform_indices = @transform_8, window_bounds = array<i64: 1, 32>}, {pipeline_mode = #tpu.pipeline_mode<synchronous>, transform_indices = @transform_9, window_bounds = array<i64: 1, 32>}, {transform_indices = @transform_10, window_bounds = array<i64: 1, 8, 32>}]} {
    %c0 = arith.constant 0 : index
    %c0_0 = arith.constant 0 : index
    %c0_1 = arith.constant 0 : index
    %0 = vector.load %arg1[%c0, %c0_0, %c0_1] : memref<1x8x32xf32, #tpu.memory_space<vmem>>, vector<1x8x32xf32>
    %1 = vector.shape_cast %0 : vector<1x8x32xf32> to vector<8x32xf32>
    %c0_2 = arith.constant 0 : index
    %c0_3 = arith.constant 0 : index
    %c0_4 = arith.constant 0 : index
    %2 = vector.load %arg1[%c0_2, %c0_3, %c0_4] : memref<1x8x32xf32, #tpu.memory_space<vmem>>, vector<1x8x32xf32>
    %3 = vector.shape_cast %2 : vector<1x8x32xf32> to vector<8x32xf32>
    %4 = arith.truncf %3 : vector<8x32xf32> to vector<8x32xbf16>
    %c0_5 = arith.constant 0 : index
    %c0_6 = arith.constant 0 : index
    %5 = vector.load %arg3[%c0_5, %c0_6] : memref<32x32xbf16, #tpu.memory_space<vmem>>, vector<32x32xbf16>
    %cst = arith.constant dense<0.000000e+00> : vector<8x32xf32>
    %6 = tpu.matmul %4, %5, %cst {dimension_numbers = #tpu.dot_dimension_numbers<[1], [0], [0], [1], [0, 0, 1, 1], [], []>} : vector<8x32xbf16>, vector<32x32xbf16>, vector<8x32xf32> -> vector<8x32xf32>
    %c0_7 = arith.constant 0 : index
    %c0_8 = arith.constant 0 : index
    %7 = vector.load %arg4[%c0_7, %c0_8] : memref<1x32xf32, #tpu.memory_space<vmem>>, vector<1x32xf32>
    %8 = vector.broadcast %7 : vector<1x32xf32> to vector<8x32xf32>
    %9 = arith.addf %6, %8 : vector<8x32xf32>
    %c0_9 = arith.constant 0 : index
    %c0_10 = arith.constant 0 : index
    %c0_11 = arith.constant 0 : index
    %10 = vector.load %arg2[%c0_9, %c0_10, %c0_11] : memref<1x8x32xf32, #tpu.memory_space<vmem>>, vector<1x8x32xf32>
    %11 = vector.shape_cast %10 : vector<1x8x32xf32> to vector<8x32xf32>
    %12 = arith.truncf %11 : vector<8x32xf32> to vector<8x32xbf16>
    %c0_12 = arith.constant 0 : index
    %c0_13 = arith.constant 0 : index
    %13 = vector.load %arg5[%c0_12, %c0_13] : memref<32x64xbf16, #tpu.memory_space<vmem>>, vector<32x64xbf16>
    %cst_14 = arith.constant dense<0.000000e+00> : vector<8x64xf32>
    %14 = tpu.matmul %12, %13, %cst_14 {dimension_numbers = #tpu.dot_dimension_numbers<[1], [0], [0], [1], [0, 0, 1, 1], [], []>} : vector<8x32xbf16>, vector<32x64xbf16>, vector<8x64xf32> -> vector<8x64xf32>
    %c0_15 = arith.constant 0 : index
    %c0_16 = arith.constant 0 : index
    %15 = vector.load %arg6[%c0_15, %c0_16] : memref<1x64xf32, #tpu.memory_space<vmem>>, vector<1x64xf32>
    %16 = vector.broadcast %15 : vector<1x64xf32> to vector<8x64xf32>
    %17 = arith.addf %14, %16 : vector<8x64xf32>
    %18 = arith.truncf %9 : vector<8x32xf32> to vector<8x32xbf16>
    %19 = vector.extract_strided_slice %17 {offsets = [0, 0], sizes = [8, 32], strides = [1, 1]} : vector<8x64xf32> to vector<8x32xf32>
    %20 = arith.truncf %19 : vector<8x32xf32> to vector<8x32xbf16>
    %21 = vector.extract_strided_slice %17 {offsets = [0, 32], sizes = [8, 32], strides = [1, 1]} : vector<8x64xf32> to vector<8x32xf32>
    %22 = arith.truncf %21 : vector<8x32xf32> to vector<8x32xbf16>
    %23 = vector.extract_strided_slice %18 {offsets = [0, 0], sizes = [8, 8], strides = [1, 1]} : vector<8x32xbf16> to vector<8x8xbf16>
    %24 = vector.extract_strided_slice %20 {offsets = [0, 0], sizes = [8, 8], strides = [1, 1]} : vector<8x32xbf16> to vector<8x8xbf16>
    %cst_17 = arith.constant dense<0.000000e+00> : vector<8x8xf32>
    %25 = tpu.matmul %23, %24, %cst_17 {dimension_numbers = #tpu.dot_dimension_numbers<[1], [1], [0], [0], [0, 0, 1, 0], [], []>} : vector<8x8xbf16>, vector<8x8xbf16>, vector<8x8xf32> -> vector<8x8xf32>
    %cst_18 = arith.constant 0.353553385 : f32
    %26 = vector.broadcast %cst_18 : f32 to vector<8x8xf32>
    %27 = arith.mulf %25, %26 : vector<8x8xf32>
    %cst_19 = arith.constant dense<0xFF800000> : vector<8xf32>
    %28 = vector.multi_reduction <maximumf>, %27, %cst_19 [1] : vector<8x8xf32> to vector<8xf32>
    %29 = vector.shape_cast %28 : vector<8xf32> to vector<8x1xf32>
    %30 = vector.broadcast %29 : vector<8x1xf32> to vector<8x8xf32>
    %31 = arith.subf %27, %30 : vector<8x8xf32>
    %32 = math.exp %31 : vector<8x8xf32>
    %cst_20 = arith.constant dense<0.000000e+00> : vector<8xf32>
    %33 = vector.multi_reduction <add>, %32, %cst_20 [1] : vector<8x8xf32> to vector<8xf32>
    %34 = vector.shape_cast %33 : vector<8xf32> to vector<8x1xf32>
    %35 = vector.broadcast %34 : vector<8x1xf32> to vector<8x8xf32>
    %36 = arith.divf %32, %35 : vector<8x8xf32>
    %37 = arith.truncf %36 : vector<8x8xf32> to vector<8x8xbf16>
    %38 = vector.extract_strided_slice %22 {offsets = [0, 0], sizes = [8, 8], strides = [1, 1]} : vector<8x32xbf16> to vector<8x8xbf16>
    %cst_21 = arith.constant dense<0.000000e+00> : vector<8x8xf32>
    %39 = tpu.matmul %37, %38, %cst_21 {dimension_numbers = #tpu.dot_dimension_numbers<[1], [0], [0], [1], [0, 0, 1, 1], [], []>} : vector<8x8xbf16>, vector<8x8xbf16>, vector<8x8xf32> -> vector<8x8xf32>
    %c0_22 = arith.constant 0 : index
    %c0_23 = arith.constant 0 : index
    %40 = vector.load %arg12[%c0_22, %c0_23] : memref<8x32xf32, #tpu.memory_space<vmem>>, vector<8x8xf32>
    tpu.vector_store %arg12[%c0_22, %c0_23], %39 {strides = array<i32>} : memref<8x32xf32, #tpu.memory_space<vmem>>, vector<8x8xf32>,
    %41 = vector.extract_strided_slice %18 {offsets = [0, 8], sizes = [8, 8], strides = [1, 1]} : vector<8x32xbf16> to vector<8x8xbf16>
    %42 = vector.extract_strided_slice %20 {offsets = [0, 8], sizes = [8, 8], strides = [1, 1]} : vector<8x32xbf16> to vector<8x8xbf16>
    %cst_24 = arith.constant dense<0.000000e+00> : vector<8x8xf32>
    %43 = tpu.matmul %41, %42, %cst_24 {dimension_numbers = #tpu.dot_dimension_numbers<[1], [1], [0], [0], [0, 0, 1, 0], [], []>} : vector<8x8xbf16>, vector<8x8xbf16>, vector<8x8xf32> -> vector<8x8xf32>
    %cst_25 = arith.constant 0.353553385 : f32
    %44 = vector.broadcast %cst_25 : f32 to vector<8x8xf32>
    %45 = arith.mulf %43, %44 : vector<8x8xf32>
    %cst_26 = arith.constant dense<0xFF800000> : vector<8xf32>
    %46 = vector.multi_reduction <maximumf>, %45, %cst_26 [1] : vector<8x8xf32> to vector<8xf32>
    %47 = vector.shape_cast %46 : vector<8xf32> to vector<8x1xf32>
    %48 = vector.broadcast %47 : vector<8x1xf32> to vector<8x8xf32>
    %49 = arith.subf %45, %48 : vector<8x8xf32>
    %50 = math.exp %49 : vector<8x8xf32>
    %cst_27 = arith.constant dense<0.000000e+00> : vector<8xf32>
    %51 = vector.multi_reduction <add>, %50, %cst_27 [1] : vector<8x8xf32> to vector<8xf32>
    %52 = vector.shape_cast %51 : vector<8xf32> to vector<8x1xf32>
    %53 = vector.broadcast %52 : vector<8x1xf32> to vector<8x8xf32>
    %54 = arith.divf %50, %53 : vector<8x8xf32>
    %55 = arith.truncf %54 : vector<8x8xf32> to vector<8x8xbf16>
    %56 = vector.extract_strided_slice %22 {offsets = [0, 8], sizes = [8, 8], strides = [1, 1]} : vector<8x32xbf16> to vector<8x8xbf16>
    %cst_28 = arith.constant dense<0.000000e+00> : vector<8x8xf32>
    %57 = tpu.matmul %55, %56, %cst_28 {dimension_numbers = #tpu.dot_dimension_numbers<[1], [0], [0], [1], [0, 0, 1, 1], [], []>} : vector<8x8xbf16>, vector<8x8xbf16>, vector<8x8xf32> -> vector<8x8xf32>
    %c0_29 = arith.constant 0 : index
    %c8 = arith.constant 8 : index
    %58 = vector.load %arg12[%c0_29, %c8] : memref<8x32xf32, #tpu.memory_space<vmem>>, vector<8x8xf32>
    tpu.vector_store %arg12[%c0_29, %c8], %57 {strides = array<i32>} : memref<8x32xf32, #tpu.memory_space<vmem>>, vector<8x8xf32>,
    %59 = vector.extract_strided_slice %18 {offsets = [0, 16], sizes = [8, 8], strides = [1, 1]} : vector<8x32xbf16> to vector<8x8xbf16>
    %60 = vector.extract_strided_slice %20 {offsets = [0, 16], sizes = [8, 8], strides = [1, 1]} : vector<8x32xbf16> to vector<8x8xbf16>
    %cst_30 = arith.constant dense<0.000000e+00> : vector<8x8xf32>
    %61 = tpu.matmul %59, %60, %cst_30 {dimension_numbers = #tpu.dot_dimension_numbers<[1], [1], [0], [0], [0, 0, 1, 0], [], []>} : vector<8x8xbf16>, vector<8x8xbf16>, vector<8x8xf32> -> vector<8x8xf32>
    %cst_31 = arith.constant 0.353553385 : f32
    %62 = vector.broadcast %cst_31 : f32 to vector<8x8xf32>
    %63 = arith.mulf %61, %62 : vector<8x8xf32>
    %cst_32 = arith.constant dense<0xFF800000> : vector<8xf32>
    %64 = vector.multi_reduction <maximumf>, %63, %cst_32 [1] : vector<8x8xf32> to vector<8xf32>
    %65 = vector.shape_cast %64 : vector<8xf32> to vector<8x1xf32>
    %66 = vector.broadcast %65 : vector<8x1xf32> to vector<8x8xf32>
    %67 = arith.subf %63, %66 : vector<8x8xf32>
    %68 = math.exp %67 : vector<8x8xf32>
    %cst_33 = arith.constant dense<0.000000e+00> : vector<8xf32>
    %69 = vector.multi_reduction <add>, %68, %cst_33 [1] : vector<8x8xf32> to vector<8xf32>
    %70 = vector.shape_cast %69 : vector<8xf32> to vector<8x1xf32>
    %71 = vector.broadcast %70 : vector<8x1xf32> to vector<8x8xf32>
    %72 = arith.divf %68, %71 : vector<8x8xf32>
    %73 = arith.truncf %72 : vector<8x8xf32> to vector<8x8xbf16>
    %74 = vector.extract_strided_slice %22 {offsets = [0, 16], sizes = [8, 8], strides = [1, 1]} : vector<8x32xbf16> to vector<8x8xbf16>
    %cst_34 = arith.constant dense<0.000000e+00> : vector<8x8xf32>
    %75 = tpu.matmul %73, %74, %cst_34 {dimension_numbers = #tpu.dot_dimension_numbers<[1], [0], [0], [1], [0, 0, 1, 1], [], []>} : vector<8x8xbf16>, vector<8x8xbf16>, vector<8x8xf32> -> vector<8x8xf32>
    %c0_35 = arith.constant 0 : index
    %c16 = arith.constant 16 : index
    %76 = vector.load %arg12[%c0_35, %c16] : memref<8x32xf32, #tpu.memory_space<vmem>>, vector<8x8xf32>
    tpu.vector_store %arg12[%c0_35, %c16], %75 {strides = array<i32>} : memref<8x32xf32, #tpu.memory_space<vmem>>, vector<8x8xf32>,
    %77 = vector.extract_strided_slice %18 {offsets = [0, 24], sizes = [8, 8], strides = [1, 1]} : vector<8x32xbf16> to vector<8x8xbf16>
    %78 = vector.extract_strided_slice %20 {offsets = [0, 24], sizes = [8, 8], strides = [1, 1]} : vector<8x32xbf16> to vector<8x8xbf16>
    %cst_36 = arith.constant dense<0.000000e+00> : vector<8x8xf32>
    %79 = tpu.matmul %77, %78, %cst_36 {dimension_numbers = #tpu.dot_dimension_numbers<[1], [1], [0], [0], [0, 0, 1, 0], [], []>} : vector<8x8xbf16>, vector<8x8xbf16>, vector<8x8xf32> -> vector<8x8xf32>
    %cst_37 = arith.constant 0.353553385 : f32
    %80 = vector.broadcast %cst_37 : f32 to vector<8x8xf32>
    %81 = arith.mulf %79, %80 : vector<8x8xf32>
    %cst_38 = arith.constant dense<0xFF800000> : vector<8xf32>
    %82 = vector.multi_reduction <maximumf>, %81, %cst_38 [1] : vector<8x8xf32> to vector<8xf32>
    %83 = vector.shape_cast %82 : vector<8xf32> to vector<8x1xf32>
    %84 = vector.broadcast %83 : vector<8x1xf32> to vector<8x8xf32>
    %85 = arith.subf %81, %84 : vector<8x8xf32>
    %86 = math.exp %85 : vector<8x8xf32>
    %cst_39 = arith.constant dense<0.000000e+00> : vector<8xf32>
    %87 = vector.multi_reduction <add>, %86, %cst_39 [1] : vector<8x8xf32> to vector<8xf32>
    %88 = vector.shape_cast %87 : vector<8xf32> to vector<8x1xf32>
    %89 = vector.broadcast %88 : vector<8x1xf32> to vector<8x8xf32>
    %90 = arith.divf %86, %89 : vector<8x8xf32>
    %91 = arith.truncf %90 : vector<8x8xf32> to vector<8x8xbf16>
    %92 = vector.extract_strided_slice %22 {offsets = [0, 24], sizes = [8, 8], strides = [1, 1]} : vector<8x32xbf16> to vector<8x8xbf16>
    %cst_40 = arith.constant dense<0.000000e+00> : vector<8x8xf32>
    %93 = tpu.matmul %91, %92, %cst_40 {dimension_numbers = #tpu.dot_dimension_numbers<[1], [0], [0], [1], [0, 0, 1, 1], [], []>} : vector<8x8xbf16>, vector<8x8xbf16>, vector<8x8xf32> -> vector<8x8xf32>
    %c0_41 = arith.constant 0 : index
    %c24 = arith.constant 24 : index
    %94 = vector.load %arg12[%c0_41, %c24] : memref<8x32xf32, #tpu.memory_space<vmem>>, vector<8x8xf32>
    tpu.vector_store %arg12[%c0_41, %c24], %93 {strides = array<i32>} : memref<8x32xf32, #tpu.memory_space<vmem>>, vector<8x8xf32>,
    %c0_42 = arith.constant 0 : index
    %c0_43 = arith.constant 0 : index
    %95 = vector.load %arg12[%c0_42, %c0_43] : memref<8x32xf32, #tpu.memory_space<vmem>>, vector<8x32xf32>
    %96 = arith.truncf %95 : vector<8x32xf32> to vector<8x32xbf16>
    %c0_44 = arith.constant 0 : index
    %c0_45 = arith.constant 0 : index
    %97 = vector.load %arg7[%c0_44, %c0_45] : memref<32x32xbf16, #tpu.memory_space<vmem>>, vector<32x32xbf16>
    %cst_46 = arith.constant dense<0.000000e+00> : vector<8x32xf32>
    %98 = tpu.matmul %96, %97, %cst_46 {dimension_numbers = #tpu.dot_dimension_numbers<[1], [0], [0], [1], [0, 0, 1, 1], [], []>} : vector<8x32xbf16>, vector<32x32xbf16>, vector<8x32xf32> -> vector<8x32xf32>
    %c0_47 = arith.constant 0 : index
    %c0_48 = arith.constant 0 : index
    %99 = vector.load %arg8[%c0_47, %c0_48] : memref<1x32xf32, #tpu.memory_space<vmem>>, vector<1x32xf32>
    %100 = vector.broadcast %99 : vector<1x32xf32> to vector<8x32xf32>
    %101 = arith.addf %98, %100 : vector<8x32xf32>
    %102 = arith.addf %101, %1 : vector<8x32xf32>
    %cst_49 = arith.constant dense<0.000000e+00> : vector<8xf32>
    %103 = vector.multi_reduction <add>, %102, %cst_49 [1] : vector<8x32xf32> to vector<8xf32>
    %104 = vector.shape_cast %103 : vector<8xf32> to vector<8x1xf32>
    %cst_50 = arith.constant 3.200000e+01 : f32
    %105 = vector.broadcast %cst_50 : f32 to vector<8x1xf32>
    %106 = arith.divf %104, %105 : vector<8x1xf32>
    %107 = vector.broadcast %106 : vector<8x1xf32> to vector<8x32xf32>
    %108 = arith.subf %102, %107 : vector<8x32xf32>
    %109 = arith.mulf %108, %108 : vector<8x32xf32>
    %cst_51 = arith.constant dense<0.000000e+00> : vector<8xf32>
    %110 = vector.multi_reduction <add>, %109, %cst_51 [1] : vector<8x32xf32> to vector<8xf32>
    %111 = vector.shape_cast %110 : vector<8xf32> to vector<8x1xf32>
    %cst_52 = arith.constant 3.200000e+01 : f32
    %112 = vector.broadcast %cst_52 : f32 to vector<8x1xf32>
    %113 = arith.divf %111, %112 : vector<8x1xf32>
    %cst_53 = arith.constant 9.99999974E-6 : f32
    %114 = vector.broadcast %cst_53 : f32 to vector<8x1xf32>
    %115 = arith.addf %113, %114 : vector<8x1xf32>
    %116 = math.rsqrt %115 : vector<8x1xf32>
    %117 = vector.broadcast %116 : vector<8x1xf32> to vector<8x32xf32>
    %118 = arith.mulf %108, %117 : vector<8x32xf32>
    %c0_54 = arith.constant 0 : index
    %c0_55 = arith.constant 0 : index
    %119 = vector.load %arg9[%c0_54, %c0_55] : memref<1x32xf32, #tpu.memory_space<vmem>>, vector<1x32xf32>
    %120 = vector.broadcast %119 : vector<1x32xf32> to vector<8x32xf32>
    %121 = arith.mulf %118, %120 : vector<8x32xf32>
    %c0_56 = arith.constant 0 : index
    %c0_57 = arith.constant 0 : index
    %122 = vector.load %arg10[%c0_56, %c0_57] : memref<1x32xf32, #tpu.memory_space<vmem>>, vector<1x32xf32>
    %123 = vector.broadcast %122 : vector<1x32xf32> to vector<8x32xf32>
    %124 = arith.addf %121, %123 : vector<8x32xf32>
    %c0_58 = arith.constant 0 : index
    %c0_59 = arith.constant 0 : index
    %c0_60 = arith.constant 0 : index
    %125 = vector.load %arg11[%c0_58, %c0_59, %c0_60] : memref<1x8x32xf32, #tpu.memory_space<vmem>>, vector<1x8x32xf32>
    %126 = vector.shape_cast %125 : vector<1x8x32xf32> to vector<8x32xf32>
    %127 = vector.shape_cast %124 : vector<8x32xf32> to vector<1x8x32xf32>
    tpu.vector_store %arg11[%c0_58, %c0_59, %c0_60], %127 {strides = array<i32>} : memref<1x8x32xf32, #tpu.memory_space<vmem>>, vector<1x8x32xf32>,
    return
  }
  func.func @transform_0(%arg0: i32) -> (i32, i32, i32) {
    %c0_i32 = arith.constant 0 : i32
    %c0_i32_0 = arith.constant 0 : i32
    %c0_i32_1 = arith.constant 0 : i32
    return %arg0, %c0_i32, %c0_i32_0 : i32, i32, i32
  }
  func.func @transform_1(%arg0: i32) -> (i32, i32, i32) {
    %c0_i32 = arith.constant 0 : i32
    %c0_i32_0 = arith.constant 0 : i32
    %c0_i32_1 = arith.constant 0 : i32
    return %arg0, %c0_i32, %c0_i32_0 : i32, i32, i32
  }
  func.func @transform_2(%arg0: i32) -> (i32, i32) {
    %c0_i32 = arith.constant 0 : i32
    %c0_i32_0 = arith.constant 0 : i32
    %c0_i32_1 = arith.constant 0 : i32
    return %c0_i32, %c0_i32_0 : i32, i32
  }
  func.func @transform_3(%arg0: i32) -> (i32, i32) {
    %c0_i32 = arith.constant 0 : i32
    %c0_i32_0 = arith.constant 0 : i32
    %c0_i32_1 = arith.constant 0 : i32
    return %c0_i32, %c0_i32_0 : i32, i32
  }
  func.func @transform_4(%arg0: i32) -> (i32, i32) {
    %c0_i32 = arith.constant 0 : i32
    %c0_i32_0 = arith.constant 0 : i32
    %c0_i32_1 = arith.constant 0 : i32
    return %c0_i32, %c0_i32_0 : i32, i32
  }
  func.func @transform_5(%arg0: i32) -> (i32, i32) {
    %c0_i32 = arith.constant 0 : i32
    %c0_i32_0 = arith.constant 0 : i32
    %c0_i32_1 = arith.constant 0 : i32
    return %c0_i32, %c0_i32_0 : i32, i32
  }
  func.func @transform_6(%arg0: i32) -> (i32, i32) {
    %c0_i32 = arith.constant 0 : i32
    %c0_i32_0 = arith.constant 0 : i32
    %c0_i32_1 = arith.constant 0 : i32
    return %c0_i32, %c0_i32_0 : i32, i32
  }
  func.func @transform_7(%arg0: i32) -> (i32, i32) {
    %c0_i32 = arith.constant 0 : i32
    %c0_i32_0 = arith.constant 0 : i32
    %c0_i32_1 = arith.constant 0 : i32
    return %c0_i32, %c0_i32_0 : i32, i32
  }
  func.func @transform_8(%arg0: i32) -> (i32, i32) {
    %c0_i32 = arith.constant 0 : i32
    %c0_i32_0 = arith.constant 0 : i32
    %c0_i32_1 = arith.constant 0 : i32
    return %c0_i32, %c0_i32_0 : i32, i32
  }
  func.func @transform_9(%arg0: i32) -> (i32, i32) {
    %c0_i32 = arith.constant 0 : i32
    %c0_i32_0 = arith.constant 0 : i32
    %c0_i32_1 = arith.constant 0 : i32
    return %c0_i32, %c0_i32_0 : i32, i32
  }
  func.func @transform_10(%arg0: i32) -> (i32, i32, i32) {
    %c0_i32 = arith.constant 0 : i32
    %c0_i32_0 = arith.constant 0 : i32
    %c0_i32_1 = arith.constant 0 : i32
    return %arg0, %c0_i32, %c0_i32_0 : i32, i32, i32
  }
}

</mosaic_0001>

<llo_original>
// kernel: tpu_custom_call.1
$region0: #{tpu_custom_call.1}
  #allocation0 [shape = 'u32[]', space=smem, size = 0x4, offset = 0x4, fixed_abs, tag = 'smem constant byte address 0x4 - core index']
  #allocation1 [shape = 'u32[144,128]{1,0:T(1,128)}', space=vmem, size = 0x12000, scoped, tag = 'internal scratch']
  #allocation2 [shape = 'f32[8,32]{1,0:T(8,128)}', space=vmem, size = 0x1000, scoped, tag = 'scratch operand']
  %s0 = inlined_call_operand.hbm [shape: f32[2,8,32], index: 0, kind: input, shape index: {}]
  %s1 = inlined_call_operand.hbm [shape: f32[2,8,32], index: 1, kind: input, shape index: {}]
  %s2 = inlined_call_operand.hbm [shape: bf16[32,32], index: 2, kind: input, shape index: {}]
  %s3 = inlined_call_operand.vmem [shape: f32[1,32], index: 3, kind: input, shape index: {}]
  %s4 = inlined_call_operand.hbm [shape: bf16[32,64], index: 4, kind: input, shape index: {}]
  %s5 = inlined_call_operand.vmem [shape: f32[1,64], index: 5, kind: input, shape index: {}]
  %s6 = inlined_call_operand.vmem [shape: bf16[32,32], index: 6, kind: input, shape index: {}]
  %s7 = inlined_call_operand.vmem [shape: f32[1,32], index: 7, kind: input, shape index: {}]
  %s8 = inlined_call_operand.vmem [shape: f32[1,32], index: 8, kind: input, shape index: {}]
  %s9 = inlined_call_operand.vmem [shape: f32[1,32], index: 9, kind: input, shape index: {}]
  %s10 = inlined_call_operand.hbm [shape: f32[2,8,32], index: 10, kind: output, shape index: {}]
  %s11 = sld [smem:[#allocation0]]
  $region89: #{tpu_custom_call.1} parent=0
    _
  %s13 = ssub.s32 1, %s11
  %s14 = scalar_select 0, %s13, %s11
  $region1: #{tpu_custom_call.1} parent=0
    #allocation3 [shape = 'u8[8192]{0}', space=vmem, size = 0x2000, scoped, tag = 'input window, operand 0']
    #allocation4 [shape = 's32[2]{0}', space=sflag, size = 0x8, scoped, tag = 'scoped memory for tpu_custom_call.1']
    #allocation5 [shape = 's32[2]{0}', space=sflag, size = 0x8, scoped, tag = 'scoped memory for tpu_custom_call.1']
    #allocation6 [shape = 'u8[8192]{0}', space=vmem, size = 0x2000, scoped, tag = 'input window, operand 1']
    #allocation7 [shape = 's32[2]{0}', space=sflag, size = 0x8, scoped, tag = 'scoped memory for tpu_custom_call.1']
    #allocation8 [shape = 'u8[8192]{0}', space=vmem, size = 0x2000, scoped, tag = 'input window, operand 2, single buffered']
    #allocation9 [shape = 'u8[8192]{0}', space=vmem, size = 0x2000, scoped, tag = 'input window, operand 4, single buffered']
    #allocation10 [shape = 's32[1]{0}', space=sflag, size = 0x4, scoped, tag = 'scoped memory for tpu_custom_call.1']
    #allocation11 [shape = 'u8[8192]{0}', space=vmem, size = 0x2000, scoped, tag = 'output window, operand 0']
    %15 = vsyncpa [#allocation4], 0
    %s16 = scalar_lea.sflag [#allocation4], 1
    %17 = vsyncpa %s16, 0
    %18 = vsyncpa [#allocation7], 0
    %s19 = scalar_lea.sflag [#allocation7], 1
    %20 = vsyncpa %s19, 0
    %21 = vsyncpa [#allocation10], 0
    %22 = vsyncpa [#allocation5], 0
    %s23 = scalar_lea.sflag [#allocation5], 1
    %24 = vsyncpa %s23, 0
    loop: start=0, step=1, limit=4
    $region2: #{tpu_custom_call.1} parent=1 // loop_pre_header
      _
    $region3: #{tpu_custom_call.1} parent=1 // loop_header
      %s26 = sphi 0, %s30
      %p27 = scmp.ge.s32.totalorder %s26, 4
      %s36 = sphi 0, %s38
      %s39 = sphi 0, %s36
      %s40 = sphi 0, %s39
      %s56 = sphi 0, %s40
      %s62 = sphi 0, %s64
      %s65 = sphi 0, %s62
      %s66 = sphi 0, %s65
      %s82 = sphi 0, %s66
      %s86 = sphi 0, %s86
      %s88 = sphi 0, %s86
      %s89 = sphi 0, %s88
      %s103 = sphi 0, %s89
      %s107 = sphi 0, %s107
      %s109 = sphi 0, %s107
      %s110 = sphi 0, %s109
      %s124 = sphi 0, %s110
      %s128 = sphi 0, %s128
      %s130 = sphi 0, %s128
      %s131 = sphi 0, %s130
      %s145 = sphi 0, %s131
      %s149 = sphi 0, %s149
      %s151 = sphi 0, %s149
      %s152 = sphi 0, %s151
      %s166 = sphi 0, %s152
      %s170 = sphi 0, %s170
      %s172 = sphi 0, %s170
      %s173 = sphi 0, %s172
      %s187 = sphi 0, %s173
      %s191 = sphi 0, %s191
      %s193 = sphi 0, %s191
      %s194 = sphi 0, %s193
      %s208 = sphi 0, %s194
      %s212 = sphi 0, %s212
      %s214 = sphi 0, %s212
      %s215 = sphi 0, %s214
      %s229 = sphi 0, %s215
      %s233 = sphi 0, %s233
      %s235 = sphi 0, %s233
      %s236 = sphi 0, %s235
      %s250 = sphi 0, %s236
      %s256 = sphi 0, %s258
      %s259 = sphi 0, %s256
      %s260 = sphi 0, %s259
      %s276 = sphi 0, %s260
    $region4: #{tpu_custom_call.1} parent=1 // loop_header_branch
      %29 = sbr.rel (%p27) target = $region8
    $region5: #{tpu_custom_call.1} parent=1 // loop_body
      %s31 = ssub.s32 %s26, 1
      %s32 = ssub.s32 %s26, 2
      %s33 = sadd.s32 %s26, 1
      %s34 = ssub.s32 %s26, %s33
      %p35 = scmp.eq.s32.totalorder %s34, 0
      %s37 = sadd.s32 %s36, 1
      %s38 = scalar_select %p35, %s36, %s37
      %p41 = pneg %p35
      %p42 = scmp.eq.s32.totalorder %s26, 1
      %p43 = por %p41, %p42
      %p44 = scmp.ne.s32.totalorder %s36, %s39
      %p45 = scmp.eq.s32.totalorder %s26, 0
      %p46 = por %p44, %p45
      %p47 = scmp.ne.s32.totalorder %s36, %s39
      %p48 = scmp.eq.s32.totalorder %s31, 1
      %p49 = por %p47, %p48
      %p50 = scmp.ne.s32.totalorder %s39, %s40
      %p51 = scmp.eq.s32.totalorder %s31, 0
      %p52 = por %p50, %p51
      %p53 = scmp.ne.s32.totalorder %s39, %s40
      %p54 = scmp.eq.s32.totalorder %s32, 1
      %p55 = por %p53, %p54
      %p57 = scmp.ne.s32.totalorder %s40, %s56
      %p58 = scmp.eq.s32.totalorder %s32, 0
      %p59 = por %p57, %p58
      %s60 = ssub.s32 %s26, %s33
      %p61 = scmp.eq.s32.totalorder %s60, 0
      %s63 = sadd.s32 %s62, 1
      %s64 = scalar_select %p61, %s62, %s63
      %p67 = pneg %p61
      %p68 = scmp.eq.s32.totalorder %s26, 1
      %p69 = por %p67, %p68
      %p70 = scmp.ne.s32.totalorder %s62, %s65
      %p71 = scmp.eq.s32.totalorder %s26, 0
      %p72 = por %p70, %p71
      %p73 = scmp.ne.s32.totalorder %s62, %s65
      %p74 = scmp.eq.s32.totalorder %s31, 1
      %p75 = por %p73, %p74
      %p76 = scmp.ne.s32.totalorder %s65, %s66
      %p77 = scmp.eq.s32.totalorder %s31, 0
      %p78 = por %p76, %p77
      %p79 = scmp.ne.s32.totalorder %s65, %s66
      %p80 = scmp.eq.s32.totalorder %s32, 1
      %p81 = por %p79, %p80
      %p83 = scmp.ne.s32.totalorder %s66, %s82
      %p84 = scmp.eq.s32.totalorder %s32, 0
      %p85 = por %p83, %p84
      %s87 = sadd.s32 %s86, 1
      %p90 = scmp.eq.s32.totalorder %s26, 1
      %p91 = scmp.ne.s32.totalorder %s86, %s88
      %p92 = scmp.eq.s32.totalorder %s26, 0
      %p93 = por %p91, %p92
      %p94 = scmp.ne.s32.totalorder %s86, %s88
      %p95 = scmp.eq.s32.totalorder %s31, 1
      %p96 = por %p94, %p95
      %p97 = scmp.ne.s32.totalorder %s88, %s89
      %p98 = scmp.eq.s32.totalorder %s31, 0
      %p99 = por %p97, %p98
      %p100 = scmp.ne.s32.totalorder %s88, %s89
      %p101 = scmp.eq.s32.totalorder %s32, 1
      %p102 = por %p100, %p101
      %p104 = scmp.ne.s32.totalorder %s89, %s103
      %p105 = scmp.eq.s32.totalorder %s32, 0
      %p106 = por %p104, %p105
      %s108 = sadd.s32 %s107, 1
      %p111 = scmp.eq.s32.totalorder %s26, 1
      %p112 = scmp.ne.s32.totalorder %s107, %s109
      %p113 = scmp.eq.s32.totalorder %s26, 0
      %p114 = por %p112, %p113
      %p115 = scmp.ne.s32.totalorder %s107, %s109
      %p116 = scmp.eq.s32.totalorder %s31, 1
      %p117 = por %p115, %p116
      %p118 = scmp.ne.s32.totalorder %s109, %s110
      %p119 = scmp.eq.s32.totalorder %s31, 0
      %p120 = por %p118, %p119
      %p121 = scmp.ne.s32.totalorder %s109, %s110
      %p122 = scmp.eq.s32.totalorder %s32, 1
      %p123 = por %p121, %p122
      %p125 = scmp.ne.s32.totalorder %s110, %s124
      %p126 = scmp.eq.s32.totalorder %s32, 0
      %p127 = por %p125, %p126
      %s129 = sadd.s32 %s128, 1
      %p132 = scmp.eq.s32.totalorder %s26, 1
      %p133 = scmp.ne.s32.totalorder %s128, %s130
      %p134 = scmp.eq.s32.totalorder %s26, 0
      %p135 = por %p133, %p134
      %p136 = scmp.ne.s32.totalorder %s128, %s130
      %p137 = scmp.eq.s32.totalorder %s31, 1
      %p138 = por %p136, %p137
      %p139 = scmp.ne.s32.totalorder %s130, %s131
      %p140 = scmp.eq.s32.totalorder %s31, 0
      %p141 = por %p139, %p140
      %p142 = scmp.ne.s32.totalorder %s130, %s131
      %p143 = scmp.eq.s32.totalorder %s32, 1
      %p144 = por %p142, %p143
      %p146 = scmp.ne.s32.totalorder %s131, %s145
      %p147 = scmp.eq.s32.totalorder %s32, 0
      %p148 = por %p146, %p147
      %s150 = sadd.s32 %s149, 1
      %p153 = scmp.eq.s32.totalorder %s26, 1
      %p154 = scmp.ne.s32.totalorder %s149, %s151
      %p155 = scmp.eq.s32.totalorder %s26, 0
      %p156 = por %p154, %p155
      %p157 = scmp.ne.s32.totalorder %s149, %s151
      %p158 = scmp.eq.s32.totalorder %s31, 1
      %p159 = por %p157, %p158
      %p160 = scmp.ne.s32.totalorder %s151, %s152
      %p161 = scmp.eq.s32.totalorder %s31, 0
      %p162 = por %p160, %p161
      %p163 = scmp.ne.s32.totalorder %s151, %s152
      %p164 = scmp.eq.s32.totalorder %s32, 1
      %p165 = por %p163, %p164
      %p167 = scmp.ne.s32.totalorder %s152, %s166
      %p168 = scmp.eq.s32.totalorder %s32, 0
      %p169 = por %p167, %p168
      %s171 = sadd.s32 %s170, 1
      %p174 = scmp.eq.s32.totalorder %s26, 1
      %p175 = scmp.ne.s32.totalorder %s170, %s172
      %p176 = scmp.eq.s32.totalorder %s26, 0
      %p177 = por %p175, %p176
      %p178 = scmp.ne.s32.totalorder %s170, %s172
      %p179 = scmp.eq.s32.totalorder %s31, 1
      %p180 = por %p178, %p179
      %p181 = scmp.ne.s32.totalorder %s172, %s173
      %p182 = scmp.eq.s32.totalorder %s31, 0
      %p183 = por %p181, %p182
      %p184 = scmp.ne.s32.totalorder %s172, %s173
      %p185 = scmp.eq.s32.totalorder %s32, 1
      %p186 = por %p184, %p185
      %p188 = scmp.ne.s32.totalorder %s173, %s187
      %p189 = scmp.eq.s32.totalorder %s32, 0
      %p190 = por %p188, %p189
      %s192 = sadd.s32 %s191, 1
      %p195 = scmp.eq.s32.totalorder %s26, 1
      %p196 = scmp.ne.s32.totalorder %s191, %s193
      %p197 = scmp.eq.s32.totalorder %s26, 0
      %p198 = por %p196, %p197
      %p199 = scmp.ne.s32.totalorder %s191, %s193
      %p200 = scmp.eq.s32.totalorder %s31, 1
      %p201 = por %p199, %p200
      %p202 = scmp.ne.s32.totalorder %s193, %s194
      %p203 = scmp.eq.s32.totalorder %s31, 0
      %p204 = por %p202, %p203
      %p205 = scmp.ne.s32.totalorder %s193, %s194
      %p206 = scmp.eq.s32.totalorder %s32, 1
      %p207 = por %p205, %p206
      %p209 = scmp.ne.s32.totalorder %s194, %s208
      %p210 = scmp.eq.s32.totalorder %s32, 0
      %p211 = por %p209, %p210
      %s213 = sadd.s32 %s212, 1
      %p216 = scmp.eq.s32.totalorder %s26, 1
      %p217 = scmp.ne.s32.totalorder %s212, %s214
      %p218 = scmp.eq.s32.totalorder %s26, 0
      %p219 = por %p217, %p218
      %p220 = scmp.ne.s32.totalorder %s212, %s214
      %p221 = scmp.eq.s32.totalorder %s31, 1
      %p222 = por %p220, %p221
      %p223 = scmp.ne.s32.totalorder %s214, %s215
      %p224 = scmp.eq.s32.totalorder %s31, 0
      %p225 = por %p223, %p224
      %p226 = scmp.ne.s32.totalorder %s214, %s215
      %p227 = scmp.eq.s32.totalorder %s32, 1
      %p228 = por %p226, %p227
      %p230 = scmp.ne.s32.totalorder %s215, %s229
      %p231 = scmp.eq.s32.totalorder %s32, 0
      %p232 = por %p230, %p231
      %s234 = sadd.s32 %s233, 1
      %p237 = scmp.eq.s32.totalorder %s26, 1
      %p238 = scmp.ne.s32.totalorder %s233, %s235
      %p239 = scmp.eq.s32.totalorder %s26, 0
      %p240 = por %p238, %p239
      %p241 = scmp.ne.s32.totalorder %s233, %s235
      %p242 = scmp.eq.s32.totalorder %s31, 1
      %p243 = por %p241, %p242
      %p244 = scmp.ne.s32.totalorder %s235, %s236
      %p245 = scmp.eq.s32.totalorder %s31, 0
      %p246 = por %p244, %p245
      %p247 = scmp.ne.s32.totalorder %s235, %s236
      %p248 = scmp.eq.s32.totalorder %s32, 1
      %p249 = por %p247, %p248
      %p251 = scmp.ne.s32.totalorder %s236, %s250
      %p252 = scmp.eq.s32.totalorder %s32, 0
      %p253 = por %p251, %p252
      %s254 = ssub.s32 %s26, %s33
      %p255 = scmp.eq.s32.totalorder %s254, 0
      %s257 = sadd.s32 %s256, 1
      %s258 = scalar_select %p255, %s256, %s257
      %p261 = pneg %p255
      %p262 = scmp.eq.s32.totalorder %s26, 1
      %p263 = por %p261, %p262
      %p264 = scmp.ne.s32.totalorder %s256, %s259
      %p265 = scmp.eq.s32.totalorder %s26, 0
      %p266 = por %p264, %p265
      %p267 = scmp.ne.s32.totalorder %s256, %s259
      %p268 = scmp.eq.s32.totalorder %s31, 1
      %p269 = por %p267, %p268
      %p270 = scmp.ne.s32.totalorder %s259, %s260
      %p271 = scmp.eq.s32.totalorder %s31, 0
      %p272 = por %p270, %p271
      %p273 = scmp.ne.s32.totalorder %s259, %s260
      %p274 = scmp.eq.s32.totalorder %s32, 1
      %p275 = por %p273, %p274
      %p277 = scmp.ne.s32.totalorder %s260, %s276
      %p278 = scmp.eq.s32.totalorder %s32, 0
      %p279 = por %p277, %p278
      %p280 = scmp.le.s32.totalorder 1, %s26
      %p281 = scmp.lt.s32.totalorder %s26, 3
      %p282 = pnand %p280, %p281
      %p283 = pneg %p282
      // Predicated region
      $region9: #{tpu_custom_call.1} parent=5 // pred_check
        _
      $region10: #{tpu_custom_call.1} parent=5 // pred_check_branch
        %285 = sbr.rel (%p282) target = $region12
      $region11: #{tpu_custom_call.1} parent=5 // pred_region
        %s286 = ssub.s32 %s26, 1
        // Predicated region
        $region13: #{tpu_custom_call.1} parent=11 // pred_check
          %p287 = pneg %p99
        $region14: #{tpu_custom_call.1} parent=11 // pred_check_branch
          %289 = sbr.rel (%p287) target = $region16
        $region15: #{tpu_custom_call.1} parent=11 // pred_region
          %s291 = ssub.s32 256, 256
          %292 = vsyncadd [#allocation7], %s291
          %s293 = sshll.u32 [#allocation8], 4
          %s294 = int_to_ptr.vmem [resolvable:$true] %s293
          %299 = dma.hbm_to_vmem [thread:$0]  %s2, 256, %s294, [#allocation7], 64, 64, 4
        $region16: #{tpu_custom_call.1} parent=11 // pred_fallthru
          _
        // Predicated region
        $region17: #{tpu_custom_call.1} parent=11 // pred_check
          %p300 = pneg %p120
        $region18: #{tpu_custom_call.1} parent=11 // pred_check_branch
          %302 = sbr.rel (%p300) target = $region20
        $region19: #{tpu_custom_call.1} parent=11 // pred_region
          _
        $region20: #{tpu_custom_call.1} parent=11 // pred_fallthru
          _
        // Predicated region
        $region21: #{tpu_custom_call.1} parent=11 // pred_check
          %p303 = pneg %p141
        $region22: #{tpu_custom_call.1} parent=11 // pred_check_branch
          %305 = sbr.rel (%p303) target = $region24
        $region23: #{tpu_custom_call.1} parent=11 // pred_region
          %s307 = ssub.s32 256, 256
          %308 = vsyncadd [#allocation10], %s307
          %s309 = sshll.u32 [#allocation9], 4
          %s310 = int_to_ptr.vmem [resolvable:$true] %s309
          %315 = dma.hbm_to_vmem [thread:$0]  %s4, 256, %s310, [#allocation10], 64, 64, 4
        $region24: #{tpu_custom_call.1} parent=11 // pred_fallthru
          _
        // Predicated region
        $region25: #{tpu_custom_call.1} parent=11 // pred_check
          %p316 = pneg %p162
        $region26: #{tpu_custom_call.1} parent=11 // pred_check_branch
          %318 = sbr.rel (%p316) target = $region28
        $region27: #{tpu_custom_call.1} parent=11 // pred_region
          _
        $region28: #{tpu_custom_call.1} parent=11 // pred_fallthru
          _
        // Predicated region
        $region29: #{tpu_custom_call.1} parent=11 // pred_check
          %p319 = pneg %p183
        $region30: #{tpu_custom_call.1} parent=11 // pred_check_branch
          %321 = sbr.rel (%p319) target = $region32
        $region31: #{tpu_custom_call.1} parent=11 // pred_region
          _
        $region32: #{tpu_custom_call.1} parent=11 // pred_fallthru
          _
        // Predicated region
        $region33: #{tpu_custom_call.1} parent=11 // pred_check
          %p322 = pneg %p204
        $region34: #{tpu_custom_call.1} parent=11 // pred_check_branch
          %324 = sbr.rel (%p322) target = $region36
        $region35: #{tpu_custom_call.1} parent=11 // pred_region
          _
        $region36: #{tpu_custom_call.1} parent=11 // pred_fallthru
          _
        // Predicated region
        $region37: #{tpu_custom_call.1} parent=11 // pred_check
          %p325 = pneg %p225
        $region38: #{tpu_custom_call.1} parent=11 // pred_check_branch
          %327 = sbr.rel (%p325) target = $region40
        $region39: #{tpu_custom_call.1} parent=11 // pred_region
          _
        $region40: #{tpu_custom_call.1} parent=11 // pred_fallthru
          _
        // Predicated region
        $region41: #{tpu_custom_call.1} parent=11 // pred_check
          %p328 = pneg %p246
        $region42: #{tpu_custom_call.1} parent=11 // pred_check_branch
          %330 = sbr.rel (%p328) target = $region44
        $region43: #{tpu_custom_call.1} parent=11 // pred_region
          _
        $region44: #{tpu_custom_call.1} parent=11 // pred_fallthru
          _
      $region12: #{tpu_custom_call.1} parent=5 // pred_fallthru
        _
      %p331 = scmp.lt.s32.totalorder %s26, 2
      // Predicated region
      $region45: #{tpu_custom_call.1} parent=5 // pred_check
        %p332 = pneg %p331
      $region46: #{tpu_custom_call.1} parent=5 // pred_check_branch
        %334 = sbr.rel (%p332) target = $region48
      $region47: #{tpu_custom_call.1} parent=5 // pred_region
        // Predicated region
        $region49: #{tpu_custom_call.1} parent=47 // pred_check
          %p335 = pneg %p46
        $region50: #{tpu_custom_call.1} parent=47 // pred_check_branch
          %337 = sbr.rel (%p335) target = $region52
        $region51: #{tpu_custom_call.1} parent=47 // pred_region
          %s338 = sand.u32 %s36, 1
          %s339 = scalar_lea.sflag [#allocation4], %s338
          %s340 = sand.u32 %s36, 1
          %s341 = smul.addr %s340, 8
          %s342 = scalar_lea.vmem [#allocation3], %s341
          %s344 = ssub.s32 128, 128
          %345 = vsyncadd %s339, %s344
          %s346 = smul.addr %s26, 128
          %s347 = scalar_lea.hbm %s0, %s346
          %s349 = sshll.u32 %s342, 4
          %s350 = int_to_ptr.vmem [resolvable:$true] %s349
          %352 = dma.hbm_to_vmem [thread:$0]  %s347, 128, %s350, %s339
        $region52: #{tpu_custom_call.1} parent=47 // pred_fallthru
          _
        // Predicated region
        $region53: #{tpu_custom_call.1} parent=47 // pred_check
          %p353 = pneg %p72
        $region54: #{tpu_custom_call.1} parent=47 // pred_check_branch
          %355 = sbr.rel (%p353) target = $region56
        $region55: #{tpu_custom_call.1} parent=47 // pred_region
          %s356 = sand.u32 %s26, 1
          %s357 = scalar_lea.sflag [#allocation7], %s356
          %s358 = sand.u32 %s62, 1
          %s359 = smul.addr %s358, 8
          %s360 = scalar_lea.vmem [#allocation6], %s359
          %s362 = ssub.s32 128, 128
          %363 = vsyncadd %s357, %s362
          %s364 = smul.addr %s26, 128
          %s365 = scalar_lea.hbm %s1, %s364
          %s367 = sshll.u32 %s360, 4
          %s368 = int_to_ptr.vmem [resolvable:$true] %s367
          %370 = dma.hbm_to_vmem [thread:$0]  %s365, 128, %s368, %s357
        $region56: #{tpu_custom_call.1} parent=47 // pred_fallthru
          _
      $region48: #{tpu_custom_call.1} parent=5 // pred_fallthru
        _
      %p371 = scmp.le.s32.totalorder 1, %s26
      %p372 = scmp.lt.s32.totalorder %s26, 3
      %p373 = pnand %p371, %p372
      %p374 = pneg %p373
      // Predicated region
      $region57: #{tpu_custom_call.1} parent=5 // pred_check
        _
      $region58: #{tpu_custom_call.1} parent=5 // pred_check_branch
        %376 = sbr.rel (%p373) target = $region60
      $region59: #{tpu_custom_call.1} parent=5 // pred_region
        %s377 = ssub.s32 %s26, 1
        %s378 = sand.u32 %s39, 1
        %s379 = scalar_lea.sflag [#allocation4], %s378
        %s380 = sand.u32 %s39, 1
        %s381 = smul.addr %s380, 8
        %s382 = scalar_lea.vmem [#allocation3], %s381
        // Predicated region
        $region61: #{tpu_custom_call.1} parent=59 // pred_check
          %p383 = pneg %p52
        $region62: #{tpu_custom_call.1} parent=59 // pred_check_branch
          %385 = sbr.rel (%p383) target = $region64
        $region63: #{tpu_custom_call.1} parent=59 // pred_region
          %386 = dma.done %s379, 128
        $region64: #{tpu_custom_call.1} parent=59 // pred_fallthru
          _
        %s387 = sand.u32 %s31, 1
        %s388 = scalar_lea.sflag [#allocation7], %s387
        %s389 = sand.u32 %s65, 1
        %s390 = smul.addr %s389, 8
        %s391 = scalar_lea.vmem [#allocation6], %s390
        // Predicated region
        $region65: #{tpu_custom_call.1} parent=59 // pred_check
          %p392 = pneg %p78
        $region66: #{tpu_custom_call.1} parent=59 // pred_check_branch
          %394 = sbr.rel (%p392) target = $region68
        $region67: #{tpu_custom_call.1} parent=59 // pred_region
          %395 = dma.done %s388, 128
        $region68: #{tpu_custom_call.1} parent=59 // pred_fallthru
          _
        // Predicated region
        $region69: #{tpu_custom_call.1} parent=59 // pred_check
          %p396 = pneg %p99
        $region70: #{tpu_custom_call.1} parent=59 // pred_check_branch
          %398 = sbr.rel (%p396) target = $region72
        $region71: #{tpu_custom_call.1} parent=59 // pred_region
          %399 = dma.done [#allocation7], 256
        $region72: #{tpu_custom_call.1} parent=59 // pred_fallthru
          _
        // Predicated region
        $region73: #{tpu_custom_call.1} parent=59 // pred_check
          %p400 = pneg %p141
        $region74: #{tpu_custom_call.1} parent=59 // pred_check_branch
          %402 = sbr.rel (%p400) target = $region76
        $region75: #{tpu_custom_call.1} parent=59 // pred_region
          %403 = dma.done [#allocation10], 256
        $region76: #{tpu_custom_call.1} parent=59 // pred_fallthru
          _
        %s404 = sand.u32 %s39, 1
        %s405 = scalar_lea.sflag [#allocation4], %s404
        %s406 = sand.u32 %s39, 1
        %s407 = smul.addr %s406, 8
        %s408 = scalar_lea.vmem [#allocation3], %s407
        %p409 = pneg %p52
        %p410 = pneg %p49
        %s411 = sand.u32 %s31, 1
        %s412 = scalar_lea.sflag [#allocation7], %s411
        %s413 = sand.u32 %s65, 1
        %s414 = smul.addr %s413, 8
        %s415 = scalar_lea.vmem [#allocation6], %s414
        %p416 = pneg %p78
        %p417 = pneg %p75
        %p418 = pneg %p99
        %p419 = pneg %p96
        %p420 = pneg %p120
        %p421 = pneg %p117
        %p422 = pneg %p141
        %p423 = pneg %p138
        %p424 = pneg %p162
        %p425 = pneg %p159
        %p426 = pneg %p183
        %p427 = pneg %p180
        %p428 = pneg %p204
        %p429 = pneg %p201
        %p430 = pneg %p225
        %p431 = pneg %p222
        %p432 = pneg %p246
        %p433 = pneg %p243
        %p434 = pneg %p272
        %p435 = pneg %p269
        %s436 = sand.u32 %s259, 1
        %s437 = scalar_lea.sflag [#allocation5], %s436
        %s438 = sand.u32 %s259, 1
        %s439 = smul.addr %s438, 8
        %s440 = scalar_lea.vmem [#allocation11], %s439
        %v442 = vld [vmem:[%s382] sm:$0xff]
        %v443 = vpack.c.bf16 %v442, %v442
        %v444 = vld [vmem:[#allocation8] sm:$0xf]
        %v445 = vld [vmem:[#allocation8 + $0x4] sm:$0xf]
        %v446 = vld [vmem:[#allocation8 + $0x8] sm:$0xf]
        %v447 = vld [vmem:[#allocation8 + $0xc] sm:$0xf]
        %v448 = vld [vmem:[%s3] sm:$0x1]
        %v450 = vlaneseq
        %v451 = vshrl.u32 %v450, 7
        %v452 = vsub.s32 0, %v451
        %v453 = vrot.slane %v448, %v452
        %v459 = vunpack.c.l.b16 %v444
        %v460 = vunpack.c.l.b16 %v445
        %v461 = vunpack.c.l.b16 %v446
        %v462 = vunpack.c.l.b16 %v447
        %v463 = vpack.c.b16 %v460, %v459
        %v464 = vpack.c.b16 %v462, %v461
        %vm467 = vcmask 261120
        %v469 = vsel %vm467, %v443, 0
        %471 = vmatprep.subr.bf16.mxu0 0
        %472 = vmatpush1.bf16.msra.mxu0 %v463
        %473 = vmatprep.subr.bf16.mxu0 0
        %474 = vmatpush1.bf16.msra.mxu0 %v464
        %475 = vmatprep.subr.bf16.mxu0 0
        %476 = vmatpush1.bf16.msra.mxu0 0
        %477 = vmatprep.subr.bf16.mxu0 0
        %478 = vmatpush1.bf16.msra.mxu0 0
        %479 = vmatprep.subr.bf16.mxu0 0
        %480 = vmatpush1.bf16.msra.mxu0 0
        %481 = vmatprep.subr.bf16.mxu0 0
        %482 = vmatpush1.bf16.msra.mxu0 0
        %483 = vmatprep.subr.bf16.mxu0 0
        %484 = vmatpush1.bf16.msra.mxu0 0
        %485 = vmatprep.subr.bf16.mxu0 0
        %486 = vmatpush1.bf16.msra.mxu0 0
        %487 = vmatprep.subr.bf16.mxu0 0
        %488 = vmatpush1.bf16.msra.mxu0 0
        %489 = vmatprep.subr.bf16.mxu0 0
        %490 = vmatpush1.bf16.msra.mxu0 0
        %491 = vmatprep.subr.bf16.mxu0 0
        %492 = vmatpush1.bf16.msra.mxu0 0
        %493 = vmatprep.subr.bf16.mxu0 0
        %494 = vmatpush1.bf16.msra.mxu0 0
        %495 = vmatprep.subr.bf16.mxu0 0
        %496 = vmatpush1.bf16.msra.mxu0 0
        %497 = vmatprep.subr.bf16.mxu0 0
        %498 = vmatpush1.bf16.msra.mxu0 0
        %499 = vmatprep.subr.bf16.mxu0 0
        %500 = vmatpush1.bf16.msra.mxu0 0
        %501 = vmatprep.subr.bf16.mxu0 0
        %502 = vmatpush1.bf16.msra.mxu0 0
        %503 = vmatprep.mubr.bf16.mxu0 0
        %504 = vmatmul.mubr.bf16.gmra.mrb[0].mxu0 %v469
        %v505 = vpop.f32.mrb[0].mxu0
        %v506 = vadd.f32 %v453, %v505
        %v507 = vpop.f32.mrb[0].mxu0
        %v508 = vpop.f32.mrb[0].mxu0
        %v509 = vpop.f32.mrb[0].mxu0
        %510 = vdwg.mxu0
        %v511 = vld [vmem:[%s391] sm:$0xff]
        %v512 = vpack.c.bf16 %v511, %v511
        %v513 = vld [vmem:[#allocation9] sm:$0xf]
        %v514 = vld [vmem:[#allocation9 + $0x4] sm:$0xf]
        %v515 = vld [vmem:[#allocation9 + $0x8] sm:$0xf]
        %v516 = vld [vmem:[#allocation9 + $0xc] sm:$0xf]
        %v517 = vld [vmem:[%s5] sm:$0x1]
        %v519 = vlaneseq
        %v520 = vshrl.u32 %v519, 7
        %v521 = vsub.s32 0, %v520
        %v522 = vrot.slane %v517, %v521
        %v528 = vunpack.c.l.b16 %v513
        %v529 = vunpack.c.l.b16 %v514
        %v530 = vunpack.c.l.b16 %v515
        %v531 = vunpack.c.l.b16 %v516
        %v532 = vpack.c.b16 %v529, %v528
        %v533 = vpack.c.b16 %v531, %v530
        %v537 = vsel %vm467, %v512, 0
        %539 = vmatprep.subr.bf16.mxu0 0
        %540 = vmatpush1.bf16.msra.mxu0 %v532
        %541 = vmatprep.subr.bf16.mxu0 0
        %542 = vmatpush1.bf16.msra.mxu0 %v533
        %543 = vmatprep.subr.bf16.mxu0 0
        %544 = vmatpush1.bf16.msra.mxu0 0
        %545 = vmatprep.subr.bf16.mxu0 0
        %546 = vmatpush1.bf16.msra.mxu0 0
        %547 = vmatprep.subr.bf16.mxu0 0
        %548 = vmatpush1.bf16.msra.mxu0 0
        %549 = vmatprep.subr.bf16.mxu0 0
        %550 = vmatpush1.bf16.msra.mxu0 0
        %551 = vmatprep.subr.bf16.mxu0 0
        %552 = vmatpush1.bf16.msra.mxu0 0
        %553 = vmatprep.subr.bf16.mxu0 0
        %554 = vmatpush1.bf16.msra.mxu0 0
        %555 = vmatprep.subr.bf16.mxu0 0
        %556 = vmatpush1.bf16.msra.mxu0 0
        %557 = vmatprep.subr.bf16.mxu0 0
        %558 = vmatpush1.bf16.msra.mxu0 0
        %559 = vmatprep.subr.bf16.mxu0 0
        %560 = vmatpush1.bf16.msra.mxu0 0
        %561 = vmatprep.subr.bf16.mxu0 0
        %562 = vmatpush1.bf16.msra.mxu0 0
        %563 = vmatprep.subr.bf16.mxu0 0
        %564 = vmatpush1.bf16.msra.mxu0 0
        %565 = vmatprep.subr.bf16.mxu0 0
        %566 = vmatpush1.bf16.msra.mxu0 0
        %567 = vmatprep.subr.bf16.mxu0 0
        %568 = vmatpush1.bf16.msra.mxu0 0
        %569 = vmatprep.subr.bf16.mxu0 0
        %570 = vmatpush1.bf16.msra.mxu0 0
        %571 = vmatprep.mubr.bf16.mxu0 0
        %572 = vmatmul.mubr.bf16.gmra.mrb[0].mxu0 %v537
        %v573 = vpop.f32.mrb[0].mxu0
        %v574 = vadd.f32 %v522, %v573
        %v575 = vpop.f32.mrb[0].mxu0
        %v576 = vpop.f32.mrb[0].mxu0
        %v577 = vpop.f32.mrb[0].mxu0
        %578 = vdwg.mxu0
        %v579 = vpack.c.bf16 %v506, %v506
        %v580 = vpack.c.bf16 %v574, %v574
        %vm581 = vcmask 64512
        %v583 = vsel %vm581, %v579, 0
        %v586 = vsel %vm581, %v580, 0
        %588 = vmatprep.subr.bf16.mxu0 0
        %589 = vmatpush1.bf16.xpose.msra.mxu0 %v586
        %590 = vmatprep.subr.bf16.mxu0 0
        %591 = vmatpush1.bf16.xpose.msra.mxu0 0
        %592 = vmatprep.subr.bf16.mxu0 0
        %593 = vmatpush1.bf16.xpose.msra.mxu0 0
        %594 = vmatprep.subr.bf16.mxu0 0
        %595 = vmatpush1.bf16.xpose.msra.mxu0 0
        %596 = vmatprep.subr.bf16.mxu0 0
        %597 = vmatpush1.bf16.xpose.msra.mxu0 0
        %598 = vmatprep.subr.bf16.mxu0 0
        %599 = vmatpush1.bf16.xpose.msra.mxu0 0
        %600 = vmatprep.subr.bf16.mxu0 0
        %601 = vmatpush1.bf16.xpose.msra.mxu0 0
        %602 = vmatprep.subr.bf16.mxu0 0
        %603 = vmatpush1.bf16.xpose.msra.mxu0 0
        %604 = vmatprep.subr.bf16.mxu0 0
        %605 = vmatpush1.bf16.xpose.msra.mxu0 0
        %606 = vmatprep.subr.bf16.mxu0 0
        %607 = vmatpush1.bf16.xpose.msra.mxu0 0
        %608 = vmatprep.subr.bf16.mxu0 0
        %609 = vmatpush1.bf16.xpose.msra.mxu0 0
        %610 = vmatprep.subr.bf16.mxu0 0
        %611 = vmatpush1.bf16.xpose.msra.mxu0 0
        %612 = vmatprep.subr.bf16.mxu0 0
        %613 = vmatpush1.bf16.xpose.msra.mxu0 0
        %614 = vmatprep.subr.bf16.mxu0 0
        %615 = vmatpush1.bf16.xpose.msra.mxu0 0
        %616 = vmatprep.subr.bf16.mxu0 0
        %617 = vmatpush1.bf16.xpose.msra.mxu0 0
        %618 = vmatprep.subr.bf16.mxu0 0
        %619 = vmatpush1.bf16.xpose.msra.mxu0 0
        %620 = vmatprep.mubr.bf16.mxu0 0
        %621 = vmatmul.mubr.bf16.gmra.mrb[0].mxu0 %v583
        %v622 = vpop.f32.mrb[0].mxu0
        %v623 = vadd.f32 0.0, %v622
        %v624 = vpop.f32.mrb[0].mxu0
        %v625 = vpop.f32.mrb[0].mxu0
        %v626 = vpop.f32.mrb[0].mxu0
        %627 = vdwg.mxu0
        %v628 = vmul.f32 %v623, 0.35355338
        %v629 = vsel %vm581, %v628, -inf
        %630 = vmax.xlane.f32.xlu0 %v629
        %v631 = vpop.xlane.xlu0 %630
        %v632 = vsub.f32 %v628, %v631
        %v633 = vmul.f32 %v632, 1.442695
        %v634 = vpow.pop %v633
        %v635 = vsel %vm581, %v634, 0.0
        %636 = vadd.xlane.f32.xlu0 %v635
        %v637 = vpop.xlane.xlu0 %636
        %v638 = vrcp.pop %v637
        %v639 = vmul.f32 %v634, %v638
        %v640 = vpack.c.bf16 %v639, %v639
        %642 = vrot.lane.b32.xlu0 %v580, 96
        %v643 = vpop.permute.xlu0 %642
        %v645 = vsel %vm581, %v640, 0
        %vm647 = vcmask 1043456
        %v649 = vsel %vm647, %v643, 0
        %651 = vmatprep.subr.bf16.mxu0 0
        %652 = vmatpush1.bf16.msra.mxu0 %v649
        %653 = vmatprep.subr.bf16.mxu0 0
        %654 = vmatpush1.bf16.msra.mxu0 0
        %655 = vmatprep.subr.bf16.mxu0 0
        %656 = vmatpush1.bf16.msra.mxu0 0
        %657 = vmatprep.subr.bf16.mxu0 0
        %658 = vmatpush1.bf16.msra.mxu0 0
        %659 = vmatprep.subr.bf16.mxu0 0
        %660 = vmatpush1.bf16.msra.mxu0 0
        %661 = vmatprep.subr.bf16.mxu0 0
        %662 = vmatpush1.bf16.msra.mxu0 0
        %663 = vmatprep.subr.bf16.mxu0 0
        %664 = vmatpush1.bf16.msra.mxu0 0
        %665 = vmatprep.subr.bf16.mxu0 0
        %666 = vmatpush1.bf16.msra.mxu0 0
        %667 = vmatprep.subr.bf16.mxu0 0
        %668 = vmatpush1.bf16.msra.mxu0 0
        %669 = vmatprep.subr.bf16.mxu0 0
        %670 = vmatpush1.bf16.msra.mxu0 0
        %671 = vmatprep.subr.bf16.mxu0 0
        %672 = vmatpush1.bf16.msra.mxu0 0
        %673 = vmatprep.subr.bf16.mxu0 0
        %674 = vmatpush1.bf16.msra.mxu0 0
        %675 = vmatprep.subr.bf16.mxu0 0
        %676 = vmatpush1.bf16.msra.mxu0 0
        %677 = vmatprep.subr.bf16.mxu0 0
        %678 = vmatpush1.bf16.msra.mxu0 0
        %679 = vmatprep.subr.bf16.mxu0 0
        %680 = vmatpush1.bf16.msra.mxu0 0
        %681 = vmatprep.subr.bf16.mxu0 0
        %682 = vmatpush1.bf16.msra.mxu0 0
        %683 = vmatprep.mubr.bf16.mxu0 0
        %684 = vmatmul.mubr.bf16.gmra.mrb[0].mxu0 %v645
        %v685 = vpop.f32.mrb[0].mxu0
        %v686 = vadd.f32 0.0, %v685
        %v687 = vpop.f32.mrb[0].mxu0
        %v688 = vpop.f32.mrb[0].mxu0
        %v689 = vpop.f32.mrb[0].mxu0
        %690 = vdwg.mxu0
        %691 = vst.msk [vmem:[#allocation2] sm:$0xff] %vm581, %v686
        %693 = vrot.lane.b32.xlu0 %v579, 120
        %v694 = vpop.permute.xlu0 %693
        %695 = vrot.lane.b32.xlu0 %v580, 120
        %v696 = vpop.permute.xlu0 %695
        %v698 = vsel %vm581, %v694, 0
        %v701 = vsel %vm581, %v696, 0
        %703 = vmatprep.subr.bf16.mxu0 0
        %704 = vmatpush1.bf16.xpose.msra.mxu0 %v701
        %705 = vmatprep.subr.bf16.mxu0 0
        %706 = vmatpush1.bf16.xpose.msra.mxu0 0
        %707 = vmatprep.subr.bf16.mxu0 0
        %708 = vmatpush1.bf16.xpose.msra.mxu0 0
        %709 = vmatprep.subr.bf16.mxu0 0
        %710 = vmatpush1.bf16.xpose.msra.mxu0 0
        %711 = vmatprep.subr.bf16.mxu0 0
        %712 = vmatpush1.bf16.xpose.msra.mxu0 0
        %713 = vmatprep.subr.bf16.mxu0 0
        %714 = vmatpush1.bf16.xpose.msra.mxu0 0
        %715 = vmatprep.subr.bf16.mxu0 0
        %716 = vmatpush1.bf16.xpose.msra.mxu0 0
        %717 = vmatprep.subr.bf16.mxu0 0
        %718 = vmatpush1.bf16.xpose.msra.mxu0 0
        %719 = vmatprep.subr.bf16.mxu0 0
        %720 = vmatpush1.bf16.xpose.msra.mxu0 0
        %721 = vmatprep.subr.bf16.mxu0 0
        %722 = vmatpush1.bf16.xpose.msra.mxu0 0
        %723 = vmatprep.subr.bf16.mxu0 0
        %724 = vmatpush1.bf16.xpose.msra.mxu0 0
        %725 = vmatprep.subr.bf16.mxu0 0
        %726 = vmatpush1.bf16.xpose.msra.mxu0 0
        %727 = vmatprep.subr.bf16.mxu0 0
        %728 = vmatpush1.bf16.xpose.msra.mxu0 0
        %729 = vmatprep.subr.bf16.mxu0 0
        %730 = vmatpush1.bf16.xpose.msra.mxu0 0
        %731 = vmatprep.subr.bf16.mxu0 0
        %732 = vmatpush1.bf16.xpose.msra.mxu0 0
        %733 = vmatprep.subr.bf16.mxu0 0
        %734 = vmatpush1.bf16.xpose.msra.mxu0 0
        %735 = vmatprep.mubr.bf16.mxu0 0
        %736 = vmatmul.mubr.bf16.gmra.mrb[0].mxu0 %v698
        %v737 = vpop.f32.mrb[0].mxu0
        %v738 = vadd.f32 0.0, %v737
        %v739 = vpop.f32.mrb[0].mxu0
        %v740 = vpop.f32.mrb[0].mxu0
        %v741 = vpop.f32.mrb[0].mxu0
        %742 = vdwg.mxu0
        %v743 = vmul.f32 %v738, 0.35355338
        %v744 = vsel %vm581, %v743, -inf
        %745 = vmax.xlane.f32.xlu0 %v744
        %v746 = vpop.xlane.xlu0 %745
        %v747 = vsub.f32 %v743, %v746
        %v748 = vmul.f32 %v747, 1.442695
        %v749 = vpow.pop %v748
        %v750 = vsel %vm581, %v749, 0.0
        %751 = vadd.xlane.f32.xlu0 %v750
        %v752 = vpop.xlane.xlu0 %751
        %v753 = vrcp.pop %v752
        %v754 = vmul.f32 %v749, %v753
        %v755 = vpack.c.bf16 %v754, %v754
        %756 = vrot.lane.b32.xlu0 %v580, 88
        %v757 = vpop.permute.xlu0 %756
        %v759 = vsel %vm581, %v755, 0
        %v762 = vsel %vm647, %v757, 0
        %764 = vmatprep.subr.bf16.mxu0 0
        %765 = vmatpush1.bf16.msra.mxu0 %v762
        %766 = vmatprep.subr.bf16.mxu0 0
        %767 = vmatpush1.bf16.msra.mxu0 0
        %768 = vmatprep.subr.bf16.mxu0 0
        %769 = vmatpush1.bf16.msra.mxu0 0
        %770 = vmatprep.subr.bf16.mxu0 0
        %771 = vmatpush1.bf16.msra.mxu0 0
        %772 = vmatprep.subr.bf16.mxu0 0
        %773 = vmatpush1.bf16.msra.mxu0 0
        %774 = vmatprep.subr.bf16.mxu0 0
        %775 = vmatpush1.bf16.msra.mxu0 0
        %776 = vmatprep.subr.bf16.mxu0 0
        %777 = vmatpush1.bf16.msra.mxu0 0
        %778 = vmatprep.subr.bf16.mxu0 0
        %779 = vmatpush1.bf16.msra.mxu0 0
        %780 = vmatprep.subr.bf16.mxu0 0
        %781 = vmatpush1.bf16.msra.mxu0 0
        %782 = vmatprep.subr.bf16.mxu0 0
        %783 = vmatpush1.bf16.msra.mxu0 0
        %784 = vmatprep.subr.bf16.mxu0 0
        %785 = vmatpush1.bf16.msra.mxu0 0
        %786 = vmatprep.subr.bf16.mxu0 0
        %787 = vmatpush1.bf16.msra.mxu0 0
        %788 = vmatprep.subr.bf16.mxu0 0
        %789 = vmatpush1.bf16.msra.mxu0 0
        %790 = vmatprep.subr.bf16.mxu0 0
        %791 = vmatpush1.bf16.msra.mxu0 0
        %792 = vmatprep.subr.bf16.mxu0 0
        %793 = vmatpush1.bf16.msra.mxu0 0
        %794 = vmatprep.subr.bf16.mxu0 0
        %795 = vmatpush1.bf16.msra.mxu0 0
        %796 = vmatprep.mubr.bf16.mxu0 0
        %797 = vmatmul.mubr.bf16.gmra.mrb[0].mxu0 %v759
        %v798 = vpop.f32.mrb[0].mxu0
        %v799 = vadd.f32 0.0, %v798
        %v800 = vpop.f32.mrb[0].mxu0
        %v801 = vpop.f32.mrb[0].mxu0
        %v802 = vpop.f32.mrb[0].mxu0
        %803 = vdwg.mxu0
        %805 = vrot.lane.b32.xlu0 %v799, 8
        %v806 = vpop.permute.xlu0 %805
        %vm808 = vcmask 130112
        %809 = vst.msk [vmem:[#allocation2] sm:$0xff] %vm808, %v806
        %810 = vrot.lane.b32.xlu0 %v579, 112
        %v811 = vpop.permute.xlu0 %810
        %812 = vrot.lane.b32.xlu0 %v580, 112
        %v813 = vpop.permute.xlu0 %812
        %v815 = vsel %vm581, %v811, 0
        %v818 = vsel %vm581, %v813, 0
        %820 = vmatprep.subr.bf16.mxu0 0
        %821 = vmatpush1.bf16.xpose.msra.mxu0 %v818
        %822 = vmatprep.subr.bf16.mxu0 0
        %823 = vmatpush1.bf16.xpose.msra.mxu0 0
        %824 = vmatprep.subr.bf16.mxu0 0
        %825 = vmatpush1.bf16.xpose.msra.mxu0 0
        %826 = vmatprep.subr.bf16.mxu0 0
        %827 = vmatpush1.bf16.xpose.msra.mxu0 0
        %828 = vmatprep.subr.bf16.mxu0 0
        %829 = vmatpush1.bf16.xpose.msra.mxu0 0
        %830 = vmatprep.subr.bf16.mxu0 0
        %831 = vmatpush1.bf16.xpose.msra.mxu0 0
        %832 = vmatprep.subr.bf16.mxu0 0
        %833 = vmatpush1.bf16.xpose.msra.mxu0 0
        %834 = vmatprep.subr.bf16.mxu0 0
        %835 = vmatpush1.bf16.xpose.msra.mxu0 0
        %836 = vmatprep.subr.bf16.mxu0 0
        %837 = vmatpush1.bf16.xpose.msra.mxu0 0
        %838 = vmatprep.subr.bf16.mxu0 0
        %839 = vmatpush1.bf16.xpose.msra.mxu0 0
        %840 = vmatprep.subr.bf16.mxu0 0
        %841 = vmatpush1.bf16.xpose.msra.mxu0 0
        %842 = vmatprep.subr.bf16.mxu0 0
        %843 = vmatpush1.bf16.xpose.msra.mxu0 0
        %844 = vmatprep.subr.bf16.mxu0 0
        %845 = vmatpush1.bf16.xpose.msra.mxu0 0
        %846 = vmatprep.subr.bf16.mxu0 0
        %847 = vmatpush1.bf16.xpose.msra.mxu0 0
        %848 = vmatprep.subr.bf16.mxu0 0
        %849 = vmatpush1.bf16.xpose.msra.mxu0 0
        %850 = vmatprep.subr.bf16.mxu0 0
        %851 = vmatpush1.bf16.xpose.msra.mxu0 0
        %852 = vmatprep.mubr.bf16.mxu0 0
        %853 = vmatmul.mubr.bf16.gmra.mrb[0].mxu0 %v815
        %v854 = vpop.f32.mrb[0].mxu0
        %v855 = vadd.f32 0.0, %v854
        %v856 = vpop.f32.mrb[0].mxu0
        %v857 = vpop.f32.mrb[0].mxu0
        %v858 = vpop.f32.mrb[0].mxu0
        %859 = vdwg.mxu0
        %v860 = vmul.f32 %v855, 0.35355338
        %v861 = vsel %vm581, %v860, -inf
        %862 = vmax.xlane.f32.xlu0 %v861
        %v863 = vpop.xlane.xlu0 %862
        %v864 = vsub.f32 %v860, %v863
        %v865 = vmul.f32 %v864, 1.442695
        %v866 = vpow.pop %v865
        %v867 = vsel %vm581, %v866, 0.0
        %868 = vadd.xlane.f32.xlu0 %v867
        %v869 = vpop.xlane.xlu0 %868
        %v870 = vrcp.pop %v869
        %v871 = vmul.f32 %v866, %v870
        %v872 = vpack.c.bf16 %v871, %v871
        %873 = vrot.lane.b32.xlu0 %v580, 80
        %v874 = vpop.permute.xlu0 %873
        %v876 = vsel %vm581, %v872, 0
        %v879 = vsel %vm647, %v874, 0
        %881 = vmatprep.subr.bf16.mxu0 0
        %882 = vmatpush1.bf16.msra.mxu0 %v879
        %883 = vmatprep.subr.bf16.mxu0 0
        %884 = vmatpush1.bf16.msra.mxu0 0
        %885 = vmatprep.subr.bf16.mxu0 0
        %886 = vmatpush1.bf16.msra.mxu0 0
        %887 = vmatprep.subr.bf16.mxu0 0
        %888 = vmatpush1.bf16.msra.mxu0 0
        %889 = vmatprep.subr.bf16.mxu0 0
        %890 = vmatpush1.bf16.msra.mxu0 0
        %891 = vmatprep.subr.bf16.mxu0 0
        %892 = vmatpush1.bf16.msra.mxu0 0
        %893 = vmatprep.subr.bf16.mxu0 0
        %894 = vmatpush1.bf16.msra.mxu0 0
        %895 = vmatprep.subr.bf16.mxu0 0
        %896 = vmatpush1.bf16.msra.mxu0 0
        %897 = vmatprep.subr.bf16.mxu0 0
        %898 = vmatpush1.bf16.msra.mxu0 0
        %899 = vmatprep.subr.bf16.mxu0 0
        %900 = vmatpush1.bf16.msra.mxu0 0
        %901 = vmatprep.subr.bf16.mxu0 0
        %902 = vmatpush1.bf16.msra.mxu0 0
        %903 = vmatprep.subr.bf16.mxu0 0
        %904 = vmatpush1.bf16.msra.mxu0 0
        %905 = vmatprep.subr.bf16.mxu0 0
        %906 = vmatpush1.bf16.msra.mxu0 0
        %907 = vmatprep.subr.bf16.mxu0 0
        %908 = vmatpush1.bf16.msra.mxu0 0
        %909 = vmatprep.subr.bf16.mxu0 0
        %910 = vmatpush1.bf16.msra.mxu0 0
        %911 = vmatprep.subr.bf16.mxu0 0
        %912 = vmatpush1.bf16.msra.mxu0 0
        %913 = vmatprep.mubr.bf16.mxu0 0
        %914 = vmatmul.mubr.bf16.gmra.mrb[0].mxu0 %v876
        %v915 = vpop.f32.mrb[0].mxu0
        %v916 = vadd.f32 0.0, %v915
        %v917 = vpop.f32.mrb[0].mxu0
        %v918 = vpop.f32.mrb[0].mxu0
        %v919 = vpop.f32.mrb[0].mxu0
        %920 = vdwg.mxu0
        %922 = vrot.lane.b32.xlu0 %v916, 16
        %v923 = vpop.permute.xlu0 %922
        %vm925 = vcmask 195712
        %926 = vst.msk [vmem:[#allocation2] sm:$0xff] %vm925, %v923
        %927 = vrot.lane.b32.xlu0 %v579, 104
        %v928 = vpop.permute.xlu0 %927
        %929 = vrot.lane.b32.xlu0 %v580, 104
        %v930 = vpop.permute.xlu0 %929
        %v932 = vsel %vm581, %v928, 0
        %v935 = vsel %vm581, %v930, 0
        %937 = vmatprep.subr.bf16.mxu0 0
        %938 = vmatpush1.bf16.xpose.msra.mxu0 %v935
        %939 = vmatprep.subr.bf16.mxu0 0
        %940 = vmatpush1.bf16.xpose.msra.mxu0 0
        %941 = vmatprep.subr.bf16.mxu0 0
        %942 = vmatpush1.bf16.xpose.msra.mxu0 0
        %943 = vmatprep.subr.bf16.mxu0 0
        %944 = vmatpush1.bf16.xpose.msra.mxu0 0
        %945 = vmatprep.subr.bf16.mxu0 0
        %946 = vmatpush1.bf16.xpose.msra.mxu0 0
        %947 = vmatprep.subr.bf16.mxu0 0
        %948 = vmatpush1.bf16.xpose.msra.mxu0 0
        %949 = vmatprep.subr.bf16.mxu0 0
        %950 = vmatpush1.bf16.xpose.msra.mxu0 0
        %951 = vmatprep.subr.bf16.mxu0 0
        %952 = vmatpush1.bf16.xpose.msra.mxu0 0
        %953 = vmatprep.subr.bf16.mxu0 0
        %954 = vmatpush1.bf16.xpose.msra.mxu0 0
        %955 = vmatprep.subr.bf16.mxu0 0
        %956 = vmatpush1.bf16.xpose.msra.mxu0 0
        %957 = vmatprep.subr.bf16.mxu0 0
        %958 = vmatpush1.bf16.xpose.msra.mxu0 0
        %959 = vmatprep.subr.bf16.mxu0 0
        %960 = vmatpush1.bf16.xpose.msra.mxu0 0
        %961 = vmatprep.subr.bf16.mxu0 0
        %962 = vmatpush1.bf16.xpose.msra.mxu0 0
        %963 = vmatprep.subr.bf16.mxu0 0
        %964 = vmatpush1.bf16.xpose.msra.mxu0 0
        %965 = vmatprep.subr.bf16.mxu0 0
        %966 = vmatpush1.bf16.xpose.msra.mxu0 0
        %967 = vmatprep.subr.bf16.mxu0 0
        %968 = vmatpush1.bf16.xpose.msra.mxu0 0
        %969 = vmatprep.mubr.bf16.mxu0 0
        %970 = vmatmul.mubr.bf16.gmra.mrb[0].mxu0 %v932
        %v971 = vpop.f32.mrb[0].mxu0
        %v972 = vadd.f32 0.0, %v971
        %v973 = vpop.f32.mrb[0].mxu0
        %v974 = vpop.f32.mrb[0].mxu0
        %v975 = vpop.f32.mrb[0].mxu0
        %976 = vdwg.mxu0
        %v977 = vmul.f32 %v972, 0.35355338
        %v978 = vsel %vm581, %v977, -inf
        %979 = vmax.xlane.f32.xlu0 %v978
        %v980 = vpop.xlane.xlu0 %979
        %v981 = vsub.f32 %v977, %v980
        %v982 = vmul.f32 %v981, 1.442695
        %v983 = vpow.pop %v982
        %v984 = vsel %vm581, %v983, 0.0
        %985 = vadd.xlane.f32.xlu0 %v984
        %v986 = vpop.xlane.xlu0 %985
        %v987 = vrcp.pop %v986
        %v988 = vmul.f32 %v983, %v987
        %v989 = vpack.c.bf16 %v988, %v988
        %990 = vrot.lane.b32.xlu0 %v580, 72
        %v991 = vpop.permute.xlu0 %990
        %v993 = vsel %vm581, %v989, 0
        %v996 = vsel %vm647, %v991, 0
        %998 = vmatprep.subr.bf16.mxu0 0
        %999 = vmatpush1.bf16.msra.mxu0 %v996
        %1000 = vmatprep.subr.bf16.mxu0 0
        %1001 = vmatpush1.bf16.msra.mxu0 0
        %1002 = vmatprep.subr.bf16.mxu0 0
        %1003 = vmatpush1.bf16.msra.mxu0 0
        %1004 = vmatprep.subr.bf16.mxu0 0
        %1005 = vmatpush1.bf16.msra.mxu0 0
        %1006 = vmatprep.subr.bf16.mxu0 0
        %1007 = vmatpush1.bf16.msra.mxu0 0
        %1008 = vmatprep.subr.bf16.mxu0 0
        %1009 = vmatpush1.bf16.msra.mxu0 0
        %1010 = vmatprep.subr.bf16.mxu0 0
        %1011 = vmatpush1.bf16.msra.mxu0 0
        %1012 = vmatprep.subr.bf16.mxu0 0
        %1013 = vmatpush1.bf16.msra.mxu0 0
        %1014 = vmatprep.subr.bf16.mxu0 0
        %1015 = vmatpush1.bf16.msra.mxu0 0
        %1016 = vmatprep.subr.bf16.mxu0 0
        %1017 = vmatpush1.bf16.msra.mxu0 0
        %1018 = vmatprep.subr.bf16.mxu0 0
        %1019 = vmatpush1.bf16.msra.mxu0 0
        %1020 = vmatprep.subr.bf16.mxu0 0
        %1021 = vmatpush1.bf16.msra.mxu0 0
        %1022 = vmatprep.subr.bf16.mxu0 0
        %1023 = vmatpush1.bf16.msra.mxu0 0
        %1024 = vmatprep.subr.bf16.mxu0 0
        %1025 = vmatpush1.bf16.msra.mxu0 0
        %1026 = vmatprep.subr.bf16.mxu0 0
        %1027 = vmatpush1.bf16.msra.mxu0 0
        %1028 = vmatprep.subr.bf16.mxu0 0
        %1029 = vmatpush1.bf16.msra.mxu0 0
        %1030 = vmatprep.mubr.bf16.mxu0 0
        %1031 = vmatmul.mubr.bf16.gmra.mrb[0].mxu0 %v993
        %v1032 = vpop.f32.mrb[0].mxu0
        %v1033 = vadd.f32 0.0, %v1032
        %v1034 = vpop.f32.mrb[0].mxu0
        %v1035 = vpop.f32.mrb[0].mxu0
        %v1036 = vpop.f32.mrb[0].mxu0
        %1037 = vdwg.mxu0
        %1039 = vrot.lane.b32.xlu0 %v1033, 24
        %v1040 = vpop.permute.xlu0 %1039
        %vm1042 = vcmask 261312
        %1043 = vst.msk [vmem:[#allocation2] sm:$0xff] %vm1042, %v1040
        %v1044 = vld [vmem:[#allocation2] sm:$0xff]
        %v1045 = vpack.c.bf16 %v1044, %v1044
        %v1046 = vld [vmem:[%s6] sm:$0xf]
        %v1047 = vld [vmem:[%s6 + $0x4] sm:$0xf]
        %v1048 = vld [vmem:[%s6 + $0x8] sm:$0xf]
        %v1049 = vld [vmem:[%s6 + $0xc] sm:$0xf]
        %v1050 = vld [vmem:[%s7] sm:$0x1]
        %v1052 = vlaneseq
        %v1053 = vshrl.u32 %v1052, 7
        %v1054 = vsub.s32 0, %v1053
        %v1055 = vrot.slane %v1050, %v1054
        %v1061 = vunpack.c.l.b16 %v1046
        %v1062 = vunpack.c.l.b16 %v1047
        %v1063 = vunpack.c.l.b16 %v1048
        %v1064 = vunpack.c.l.b16 %v1049
        %v1065 = vpack.c.b16 %v1062, %v1061
        %v1066 = vpack.c.b16 %v1064, %v1063
        %v1070 = vsel %vm467, %v1045, 0
        %1072 = vmatprep.subr.bf16.mxu0 0
        %1073 = vmatpush1.bf16.msra.mxu0 %v1065
        %1074 = vmatprep.subr.bf16.mxu0 0
        %1075 = vmatpush1.bf16.msra.mxu0 %v1066
        %1076 = vmatprep.subr.bf16.mxu0 0
        %1077 = vmatpush1.bf16.msra.mxu0 0
        %1078 = vmatprep.subr.bf16.mxu0 0
        %1079 = vmatpush1.bf16.msra.mxu0 0
        %1080 = vmatprep.subr.bf16.mxu0 0
        %1081 = vmatpush1.bf16.msra.mxu0 0
        %1082 = vmatprep.subr.bf16.mxu0 0
        %1083 = vmatpush1.bf16.msra.mxu0 0
        %1084 = vmatprep.subr.bf16.mxu0 0
        %1085 = vmatpush1.bf16.msra.mxu0 0
        %1086 = vmatprep.subr.bf16.mxu0 0
        %1087 = vmatpush1.bf16.msra.mxu0 0
        %1088 = vmatprep.subr.bf16.mxu0 0
        %1089 = vmatpush1.bf16.msra.mxu0 0
        %1090 = vmatprep.subr.bf16.mxu0 0
        %1091 = vmatpush1.bf16.msra.mxu0 0
        %1092 = vmatprep.subr.bf16.mxu0 0
        %1093 = vmatpush1.bf16.msra.mxu0 0
        %1094 = vmatprep.subr.bf16.mxu0 0
        %1095 = vmatpush1.bf16.msra.mxu0 0
        %1096 = vmatprep.subr.bf16.mxu0 0
        %1097 = vmatpush1.bf16.msra.mxu0 0
        %1098 = vmatprep.subr.bf16.mxu0 0
        %1099 = vmatpush1.bf16.msra.mxu0 0
        %1100 = vmatprep.subr.bf16.mxu0 0
        %1101 = vmatpush1.bf16.msra.mxu0 0
        %1102 = vmatprep.subr.bf16.mxu0 0
        %1103 = vmatpush1.bf16.msra.mxu0 0
        %1104 = vmatprep.mubr.bf16.mxu0 0
        %1105 = vmatmul.mubr.bf16.gmra.mrb[0].mxu0 %v1070
        %v1106 = vpop.f32.mrb[0].mxu0
        %v1107 = vadd.f32 %v1055, %v1106
        %v1108 = vpop.f32.mrb[0].mxu0
        %v1109 = vpop.f32.mrb[0].mxu0
        %v1110 = vpop.f32.mrb[0].mxu0
        %1111 = vdwg.mxu0
        %v1112 = vadd.f32 %v1107, %v442
        %v1113 = vsel %vm467, %v1112, 0.0
        %1114 = vadd.xlane.f32.xlu0 %v1113
        %v1115 = vpop.xlane.xlu0 %1114
        %v1116 = vrcp.pop 32.0
        %v1117 = vmul.f32 %v1115, %v1116
        %v1118 = vsub.f32 %v1112, %v1117
        %v1119 = vmul.f32 %v1118, %v1118
        %v1120 = vsel %vm467, %v1119, 0.0
        %1121 = vadd.xlane.f32.xlu0 %v1120
        %v1122 = vpop.xlane.xlu0 %1121
        %v1123 = vmul.f32 %v1122, %v1116
        %v1124 = vadd.f32 %v1123, 1e-05
        %v1125 = vrsqrt.pop %v1124
        %v1126 = vmul.f32 %v1118, %v1125
        %v1127 = vld [vmem:[%s8] sm:$0x1]
        %v1129 = vlaneseq
        %v1130 = vshrl.u32 %v1129, 7
        %v1131 = vsub.s32 0, %v1130
        %v1132 = vrot.slane %v1127, %v1131
        %v1134 = vmul.f32 %v1126, %v1132
        %v1135 = vld [vmem:[%s9] sm:$0x1]
        %v1137 = vlaneseq
        %v1138 = vshrl.u32 %v1137, 7
        %v1139 = vsub.s32 0, %v1138
        %v1140 = vrot.slane %v1135, %v1139
        %v1142 = vadd.f32 %v1134, %v1140
        %1143 = vst.msk [vmem:[%s440] sm:$0xff] %vm467, %v1142
        %s1144 = sand.u32 %s259, 1
        %s1145 = scalar_lea.sflag [#allocation5], %s1144
        %s1146 = sand.u32 %s259, 1
        %s1147 = smul.addr %s1146, 8
        %s1148 = scalar_lea.vmem [#allocation11], %s1147
        // Predicated region
        $region77: #{tpu_custom_call.1} parent=59 // pred_check
          %p1149 = pneg %p269
        $region78: #{tpu_custom_call.1} parent=59 // pred_check_branch
          %1151 = sbr.rel (%p1149) target = $region80
        $region79: #{tpu_custom_call.1} parent=59 // pred_region
          %s1153 = ssub.s32 128, 128
          %1154 = vsyncadd %s1145, %s1153
          %s1155 = smul.addr %s31, 128
          %s1156 = scalar_lea.hbm %s10, %s1155
          %s1158 = sshll.u32 %s1148, 4
          %s1159 = int_to_ptr.vmem [resolvable:$true] %s1158
          %1161 = dma.vmem_to_hbm [thread:$0]  %s1159, 128, %s1156, %s1145
        $region80: #{tpu_custom_call.1} parent=59 // pred_fallthru
          _
      $region60: #{tpu_custom_call.1} parent=5 // pred_fallthru
        _
      %p1162 = scmp.le.s32.totalorder 2, %s26
      // Predicated region
      $region81: #{tpu_custom_call.1} parent=5 // pred_check
        %p1163 = pneg %p1162
      $region82: #{tpu_custom_call.1} parent=5 // pred_check_branch
        %1165 = sbr.rel (%p1163) target = $region84
      $region83: #{tpu_custom_call.1} parent=5 // pred_region
        %s1166 = ssub.s32 %s26, 2
        // Predicated region
        $region85: #{tpu_custom_call.1} parent=83 // pred_check
          %p1167 = pneg %p275
        $region86: #{tpu_custom_call.1} parent=83 // pred_check_branch
          %1169 = sbr.rel (%p1167) target = $region88
        $region87: #{tpu_custom_call.1} parent=83 // pred_region
          %s1170 = sand.u32 %s260, 1
          %s1171 = scalar_lea.sflag [#allocation5], %s1170
          %s1172 = sand.u32 %s260, 1
          %s1173 = smul.addr %s1172, 8
          %s1174 = scalar_lea.vmem [#allocation11], %s1173
          %1175 = dma.done %s1171, 128
        $region88: #{tpu_custom_call.1} parent=83 // pred_fallthru
          _
      $region84: #{tpu_custom_call.1} parent=5 // pred_fallthru
        _
    $region6: #{tpu_custom_call.1} parent=1 // loop_footer
      %s30 = sadd.s32 1, %s26
    $region7: #{tpu_custom_call.1} parent=1 // loop_footer_branch
      %25 = sbr.rel target = $region3
    $region8: #{tpu_custom_call.1} parent=1 // loop_exit
      _
    %1176 = vsyncpa [#allocation4], 1
    %s1177 = scalar_lea.sflag [#allocation4], 1
    %1178 = vsyncpa %s1177, 1
    %1179 = vsyncpa [#allocation7], 1
    %s1180 = scalar_lea.sflag [#allocation7], 1
    %1181 = vsyncpa %s1180, 1
    %1182 = vsyncpa [#allocation10], 1
    %1183 = vsyncpa [#allocation5], 1
    %s1184 = scalar_lea.sflag [#allocation5], 1
    %1185 = vsyncpa %s1184, 1

</llo_original>
